<compile_context>
chip_gen: v7x
topology: tpu7x:2x2x1
jax: 0.10.0
libtpu: 0.0.40
codegen_flags: <defaults>
</compile_context>

<pallas_src>
from functools import partial

import jax
import jax.numpy as jnp
from jax import lax
from jax.experimental import pallas as pl
from jax.experimental.pallas import tpu as pltpu


def _round_up(x, m):
    return (x + m - 1) // m * m


def rbm_cd_kernel(v_ref, wt_ref, w_ref, bv_ref, bh_ref, uh_ref, uv_ref,
                  vs_ref, *, cd_k):
    """Full CD-K Gibbs chain for one batch tile.

    v_ref : (TB, V)  bf16   visible input tile ({0,1})
    wt_ref: (V, H)   bf16   pre-transposed weights (hidden pass, NN dot)
    w_ref : (H, V)   bf16   weights (visible pass, NN dot)
    bv_ref: (1, V)   f32    visible bias
    bh_ref: (1, H)   f32    hidden bias
    uh_ref: (K, TB, H) f32  uniforms for hidden Bernoulli draws
    uv_ref: (K, TB, V) f32  uniforms for visible Bernoulli draws
    vs_ref: (TB, V)  f32    output sample
    """
    tb, vdim = v_ref.shape
    hdim = w_ref.shape[0]

    wt = wt_ref[...]                                    # (V, H) bf16
    w = w_ref[...]                                      # (H, V) bf16
    # Hoist loop-invariant bias broadcasts (JAX does not CSE broadcast_in_dim).
    bh_b = jnp.broadcast_to(bh_ref[...], (tb, hdim))    # (TB, H) f32
    bv_b = jnp.broadcast_to(bv_ref[...], (tb, vdim))    # (TB, V) f32

    def gibbs_step(k, vs_b):
        # sample_h: sigmoid(vs @ w.T + bh)  -- NN dot against pre-transposed w
        h_lin = jnp.dot(vs_b, wt, preferred_element_type=jnp.float32) + bh_b
        prob_h = jax.nn.sigmoid(h_lin)
        samp_h = (uh_ref[k] < prob_h).astype(jnp.bfloat16)
        # sample_v: sigmoid(samp_h @ w + bv)
        v_lin = jnp.dot(samp_h, w, preferred_element_type=jnp.float32) + bv_b
        prob_v = jax.nn.sigmoid(v_lin)
        return (uv_ref[k] < prob_v).astype(jnp.bfloat16)

    vs = v_ref[...]                                     # (TB, V) bf16, {0,1}
    if cd_k <= 4:
        # small static trip count -> unroll for LLO scheduler visibility
        for k in range(cd_k):
            vs = gibbs_step(k, vs)
    else:
        # large cd_k -> bounded live ranges / code size
        vs = lax.fori_loop(0, cd_k, gibbs_step, vs)

    vs_ref[...] = vs.astype(jnp.float32)                # exact: values are {0,1}


def rbm_forward(v, w, bv, bh, seed=0, cd_k=1, tb=128):
    """Pallas-backed equivalent of RBM.forward: returns (v, vs)."""
    B, V = v.shape
    H, V2 = w.shape
    assert V == V2

    # Lane-dense padding (multiples of 128 on feature dims; zero pads are inert).
    Vp = _round_up(V, 128)
    Hp = _round_up(H, 128)
    tb_eff = max(8, min(tb, _round_up(B, 8)))
    Bp = _round_up(B, tb_eff)
    num_tiles = Bp // tb_eff

    w_bf = w.astype(jnp.bfloat16)
    v_p = jnp.pad(v.astype(jnp.bfloat16), ((0, Bp - B), (0, Vp - V)))
    w_p = jnp.pad(w_bf, ((0, Hp - H), (0, Vp - V)))          # (Hp, Vp)
    wt_p = jnp.pad(w_bf.T, ((0, Vp - V), (0, Hp - H)))        # (Vp, Hp)
    bv_p = jnp.pad(bv.astype(jnp.float32), (0, Vp - V)).reshape(1, Vp)
    bh_p = jnp.pad(bh.astype(jnp.float32), (0, Hp - H)).reshape(1, Hp)

    # Precomputed uniform streams for the Bernoulli draws (one per CD step).
    # TODO(synk): no Pallas equivalent of torch's RNG stream; this is
    # deterministic for a fixed seed but not bit-identical to torch.bernoulli.
    k_h, k_v = jax.random.split(jax.random.PRNGKey(seed))
    u_h = jax.random.uniform(k_h, (cd_k, Bp, Hp), dtype=jnp.float32)
    u_v = jax.random.uniform(k_v, (cd_k, Bp, Vp), dtype=jnp.float32)

    vs = pl.pallas_call(
        partial(rbm_cd_kernel, cd_k=cd_k),
        out_shape=jax.ShapeDtypeStruct((Bp, Vp), jnp.float32),
        grid_spec=pltpu.PrefetchScalarGridSpec(
            num_scalar_prefetch=0,
            grid=(num_tiles,),
            in_specs=[
                pl.BlockSpec((tb_eff, Vp), lambda i: (i, 0)),        # v tile
                pl.BlockSpec((Vp, Hp), lambda i: (0, 0)),            # w_t (resident)
                pl.BlockSpec((Hp, Vp), lambda i: (0, 0)),            # w   (resident)
                pl.BlockSpec((1, Vp), lambda i: (0, 0)),             # bv
                pl.BlockSpec((1, Hp), lambda i: (0, 0)),             # bh
                pl.BlockSpec((cd_k, tb_eff, Hp), lambda i: (0, i, 0)),  # uniforms (h)
                pl.BlockSpec((cd_k, tb_eff, Vp), lambda i: (0, i, 0)),  # uniforms (v)
            ],
            out_specs=pl.BlockSpec((tb_eff, Vp), lambda i: (i, 0)),
        ),
        compiler_params=pltpu.CompilerParams(
            dimension_semantics=("parallel",)),   # batch tiles are independent
    )(v_p, wt_p, w_p, bv_p, bh_p, u_h, u_v)

    return v, vs[:B, :V]


if __name__ == "__main__":
    # MXU/lane-friendly small sizes consistent with RBM(vsize, hsize)
    B, V, H = 256, 256, 128
    CD_K = 2

    key = jax.random.PRNGKey(0)
    k_w, k_bv, k_bh, k_v = jax.random.split(key, 4)

    # deterministic synthetic parameters, matching __init__: randn * 0.01
    w = jax.random.normal(k_w, (H, V), dtype=jnp.float32) * 0.01
    bv = jax.random.normal(k_bv, (V,), dtype=jnp.float32) * 0.01
    bh = jax.random.normal(k_bh, (H,), dtype=jnp.float32) * 0.01

    # binary visible input, as typical for an RBM
    v = jax.random.bernoulli(k_v, 0.5, (B, V)).astype(jnp.float32)

    v_out, vs_out = rbm_forward(v, w, bv, bh, seed=1234, cd_k=CD_K)
    jax.block_until_ready((v_out, vs_out))

    assert v_out.shape == (B, V) and vs_out.shape == (B, V)
    assert bool(jnp.all(v_out == v))                         # forward returns input v
    assert bool(jnp.all((vs_out == 0.0) | (vs_out == 1.0)))  # Bernoulli samples

    print("KERNEL_OK")
</pallas_src>

<mosaic_0001>
module attributes {stable_mosaic.version = 11 : i64} {
  func.func @rbm_cd_kernel(%arg0: i32, %arg1: memref<128x256xbf16, #tpu.memory_space<vmem>>, %arg2: memref<256x128xbf16, #tpu.memory_space<vmem>>, %arg3: memref<128x256xbf16, #tpu.memory_space<vmem>>, %arg4: memref<1x256xf32, #tpu.memory_space<vmem>>, %arg5: memref<1x128xf32, #tpu.memory_space<vmem>>, %arg6: memref<2x128x128xf32, #tpu.memory_space<vmem>>, %arg7: memref<2x128x256xf32, #tpu.memory_space<vmem>>, %arg8: memref<128x256xf32, #tpu.memory_space<vmem>>) attributes {dimension_semantics = [#tpu.dimension_semantics<parallel>], iteration_bounds = array<i64: 2>, scalar_prefetch = 0 : i64, scratch_operands = 0 : i64, tpu.core_type = #tpu.core_type<tc>, window_params = [{transform_indices = @transform_0, window_bounds = array<i64: 128, 256>}, {pipeline_mode = #tpu.pipeline_mode<synchronous>, transform_indices = @transform_1, window_bounds = array<i64: 256, 128>}, {pipeline_mode = #tpu.pipeline_mode<synchronous>, transform_indices = @transform_2, window_bounds = array<i64: 128, 256>}, {pipeline_mode = #tpu.pipeline_mode<synchronous>, transform_indices = @transform_3, window_bounds = array<i64: 1, 256>}, {pipeline_mode = #tpu.pipeline_mode<synchronous>, transform_indices = @transform_4, window_bounds = array<i64: 1, 128>}, {transform_indices = @transform_5, window_bounds = array<i64: 2, 128, 128>}, {transform_indices = @transform_6, window_bounds = array<i64: 2, 128, 256>}, {transform_indices = @transform_7, window_bounds = array<i64: 128, 256>}]} {
    %c0 = arith.constant 0 : index
    %c0_0 = arith.constant 0 : index
    %0 = vector.load %arg2[%c0, %c0_0] : memref<256x128xbf16, #tpu.memory_space<vmem>>, vector<256x128xbf16>
    %c0_1 = arith.constant 0 : index
    %c0_2 = arith.constant 0 : index
    %1 = vector.load %arg3[%c0_1, %c0_2] : memref<128x256xbf16, #tpu.memory_space<vmem>>, vector<128x256xbf16>
    %c0_3 = arith.constant 0 : index
    %c0_4 = arith.constant 0 : index
    %2 = vector.load %arg5[%c0_3, %c0_4] : memref<1x128xf32, #tpu.memory_space<vmem>>, vector<1x128xf32>
    %3 = vector.shape_cast %2 : vector<1x128xf32> to vector<1x128xf32>
    %4 = vector.broadcast %3 : vector<1x128xf32> to vector<128x128xf32>
    %c0_5 = arith.constant 0 : index
    %c0_6 = arith.constant 0 : index
    %5 = vector.load %arg4[%c0_5, %c0_6] : memref<1x256xf32, #tpu.memory_space<vmem>>, vector<1x256xf32>
    %6 = vector.shape_cast %5 : vector<1x256xf32> to vector<1x256xf32>
    %7 = vector.broadcast %6 : vector<1x256xf32> to vector<128x256xf32>
    %c0_7 = arith.constant 0 : index
    %c0_8 = arith.constant 0 : index
    %8 = vector.load %arg1[%c0_7, %c0_8] : memref<128x256xbf16, #tpu.memory_space<vmem>>, vector<128x256xbf16>
    %cst = arith.constant dense<0.000000e+00> : vector<128x128xf32>
    %9 = tpu.matmul %8, %0, %cst {dimension_numbers = #tpu.dot_dimension_numbers<[1], [0], [0], [1], [0, 0, 1, 1], [], []>} : vector<128x256xbf16>, vector<256x128xbf16>, vector<128x128xf32> -> vector<128x128xf32>
    %10 = arith.addf %9, %4 : vector<128x128xf32>
    %11 = arith.negf %10 : vector<128x128xf32>
    %12 = math.exp %11 : vector<128x128xf32>
    %cst_9 = arith.constant 1.000000e+00 : f32
    %13 = vector.broadcast %cst_9 : f32 to vector<128x128xf32>
    %14 = arith.addf %13, %12 : vector<128x128xf32>
    %15 = arith.divf %13, %14 : vector<128x128xf32>
    %c0_10 = arith.constant 0 : index
    %c0_11 = arith.constant 0 : index
    %c0_12 = arith.constant 0 : index
    %16 = vector.load %arg6[%c0_10, %c0_11, %c0_12] : memref<2x128x128xf32, #tpu.memory_space<vmem>>, vector<1x128x128xf32>
    %17 = vector.shape_cast %16 : vector<1x128x128xf32> to vector<128x128xf32>
    %18 = arith.cmpf olt, %17, %15 : vector<128x128xf32>
    %19 = arith.extui %18 : vector<128x128xi1> to vector<128x128xi32>
    %20 = arith.sitofp %19 : vector<128x128xi32> to vector<128x128xf32>
    %21 = arith.truncf %20 : vector<128x128xf32> to vector<128x128xbf16>
    %cst_13 = arith.constant dense<0.000000e+00> : vector<128x256xf32>
    %22 = tpu.matmul %21, %1, %cst_13 {dimension_numbers = #tpu.dot_dimension_numbers<[1], [0], [0], [1], [0, 0, 1, 1], [], []>} : vector<128x128xbf16>, vector<128x256xbf16>, vector<128x256xf32> -> vector<128x256xf32>
    %23 = arith.addf %22, %7 : vector<128x256xf32>
    %24 = arith.negf %23 : vector<128x256xf32>
    %25 = math.exp %24 : vector<128x256xf32>
    %cst_14 = arith.constant 1.000000e+00 : f32
    %26 = vector.broadcast %cst_14 : f32 to vector<128x256xf32>
    %27 = arith.addf %26, %25 : vector<128x256xf32>
    %28 = arith.divf %26, %27 : vector<128x256xf32>
    %c0_15 = arith.constant 0 : index
    %c0_16 = arith.constant 0 : index
    %c0_17 = arith.constant 0 : index
    %29 = vector.load %arg7[%c0_15, %c0_16, %c0_17] : memref<2x128x256xf32, #tpu.memory_space<vmem>>, vector<1x128x256xf32>
    %30 = vector.shape_cast %29 : vector<1x128x256xf32> to vector<128x256xf32>
    %31 = arith.cmpf olt, %30, %28 : vector<128x256xf32>
    %32 = arith.extui %31 : vector<128x256xi1> to vector<128x256xi32>
    %33 = arith.sitofp %32 : vector<128x256xi32> to vector<128x256xf32>
    %34 = arith.truncf %33 : vector<128x256xf32> to vector<128x256xbf16>
    %cst_18 = arith.constant dense<0.000000e+00> : vector<128x128xf32>
    %35 = tpu.matmul %34, %0, %cst_18 {dimension_numbers = #tpu.dot_dimension_numbers<[1], [0], [0], [1], [0, 0, 1, 1], [], []>} : vector<128x256xbf16>, vector<256x128xbf16>, vector<128x128xf32> -> vector<128x128xf32>
    %36 = arith.addf %35, %4 : vector<128x128xf32>
    %37 = arith.negf %36 : vector<128x128xf32>
    %38 = math.exp %37 : vector<128x128xf32>
    %cst_19 = arith.constant 1.000000e+00 : f32
    %39 = vector.broadcast %cst_19 : f32 to vector<128x128xf32>
    %40 = arith.addf %39, %38 : vector<128x128xf32>
    %41 = arith.divf %39, %40 : vector<128x128xf32>
    %c1 = arith.constant 1 : index
    %c0_20 = arith.constant 0 : index
    %c0_21 = arith.constant 0 : index
    %42 = vector.load %arg6[%c1, %c0_20, %c0_21] : memref<2x128x128xf32, #tpu.memory_space<vmem>>, vector<1x128x128xf32>
    %43 = vector.shape_cast %42 : vector<1x128x128xf32> to vector<128x128xf32>
    %44 = arith.cmpf olt, %43, %41 : vector<128x128xf32>
    %45 = arith.extui %44 : vector<128x128xi1> to vector<128x128xi32>
    %46 = arith.sitofp %45 : vector<128x128xi32> to vector<128x128xf32>
    %47 = arith.truncf %46 : vector<128x128xf32> to vector<128x128xbf16>
    %cst_22 = arith.constant dense<0.000000e+00> : vector<128x256xf32>
    %48 = tpu.matmul %47, %1, %cst_22 {dimension_numbers = #tpu.dot_dimension_numbers<[1], [0], [0], [1], [0, 0, 1, 1], [], []>} : vector<128x128xbf16>, vector<128x256xbf16>, vector<128x256xf32> -> vector<128x256xf32>
    %49 = arith.addf %48, %7 : vector<128x256xf32>
    %50 = arith.negf %49 : vector<128x256xf32>
    %51 = math.exp %50 : vector<128x256xf32>
    %cst_23 = arith.constant 1.000000e+00 : f32
    %52 = vector.broadcast %cst_23 : f32 to vector<128x256xf32>
    %53 = arith.addf %52, %51 : vector<128x256xf32>
    %54 = arith.divf %52, %53 : vector<128x256xf32>
    %c1_24 = arith.constant 1 : index
    %c0_25 = arith.constant 0 : index
    %c0_26 = arith.constant 0 : index
    %55 = vector.load %arg7[%c1_24, %c0_25, %c0_26] : memref<2x128x256xf32, #tpu.memory_space<vmem>>, vector<1x128x256xf32>
    %56 = vector.shape_cast %55 : vector<1x128x256xf32> to vector<128x256xf32>
    %57 = arith.cmpf olt, %56, %54 : vector<128x256xf32>
    %58 = arith.extui %57 : vector<128x256xi1> to vector<128x256xi32>
    %59 = arith.sitofp %58 : vector<128x256xi32> to vector<128x256xf32>
    %60 = arith.truncf %59 : vector<128x256xf32> to vector<128x256xbf16>
    %61 = arith.extf %60 : vector<128x256xbf16> to vector<128x256xf32>
    %c0_27 = arith.constant 0 : index
    %c0_28 = arith.constant 0 : index
    %62 = vector.load %arg8[%c0_27, %c0_28] : memref<128x256xf32, #tpu.memory_space<vmem>>, vector<128x256xf32>
    tpu.vector_store %arg8[%c0_27, %c0_28], %61 {strides = array<i32>} : memref<128x256xf32, #tpu.memory_space<vmem>>, vector<128x256xf32>,
    return
  }
  func.func @transform_0(%arg0: i32) -> (i32, i32) {
    %c0_i32 = arith.constant 0 : i32
    %c0_i32_0 = arith.constant 0 : i32
    return %arg0, %c0_i32 : i32, i32
  }
  func.func @transform_1(%arg0: i32) -> (i32, i32) {
    %c0_i32 = arith.constant 0 : i32
    %c0_i32_0 = arith.constant 0 : i32
    %c0_i32_1 = arith.constant 0 : i32
    return %c0_i32, %c0_i32_0 : i32, i32
  }
  func.func @transform_2(%arg0: i32) -> (i32, i32) {
    %c0_i32 = arith.constant 0 : i32
    %c0_i32_0 = arith.constant 0 : i32
    %c0_i32_1 = arith.constant 0 : i32
    return %c0_i32, %c0_i32_0 : i32, i32
  }
  func.func @transform_3(%arg0: i32) -> (i32, i32) {
    %c0_i32 = arith.constant 0 : i32
    %c0_i32_0 = arith.constant 0 : i32
    %c0_i32_1 = arith.constant 0 : i32
    return %c0_i32, %c0_i32_0 : i32, i32
  }
  func.func @transform_4(%arg0: i32) -> (i32, i32) {
    %c0_i32 = arith.constant 0 : i32
    %c0_i32_0 = arith.constant 0 : i32
    %c0_i32_1 = arith.constant 0 : i32
    return %c0_i32, %c0_i32_0 : i32, i32
  }
  func.func @transform_5(%arg0: i32) -> (i32, i32, i32) {
    %c0_i32 = arith.constant 0 : i32
    %c0_i32_0 = arith.constant 0 : i32
    %c0_i32_1 = arith.constant 0 : i32
    return %c0_i32, %arg0, %c0_i32_0 : i32, i32, i32
  }
  func.func @transform_6(%arg0: i32) -> (i32, i32, i32) {
    %c0_i32 = arith.constant 0 : i32
    %c0_i32_0 = arith.constant 0 : i32
    %c0_i32_1 = arith.constant 0 : i32
    return %c0_i32, %arg0, %c0_i32_0 : i32, i32, i32
  }
  func.func @transform_7(%arg0: i32) -> (i32, i32) {
    %c0_i32 = arith.constant 0 : i32
    %c0_i32_0 = arith.constant 0 : i32
    return %arg0, %c0_i32 : i32, i32
  }
}

</mosaic_0001>

<llo_original>
// kernel: tpu_custom_call.1
$region0: #{tpu_custom_call.1}
  #allocation0 [shape = 'u32[]', space=smem, size = 0x4, offset = 0x4, fixed_abs, tag = 'smem constant byte address 0x4 - core index']
  #allocation1 [shape = 'u32[144,128]{1,0:T(1,128)}', space=vmem, size = 0x12000, scoped, tag = 'internal scratch']
  #allocation12 [shape = 's32[]', space=sflag, size = 0x4, offset = 0, fixed_abs, tag = 'sflag constant byte address 0x0 - dummy sync flag']
  #allocation14 [shape = 's32[]', space=sflag, size = 0x4, offset = 0, fixed_abs, tag = 'sflag constant byte address 0x0 - dummy sync flag']
  %s0 = inlined_call_operand.hbm [shape: bf16[256,256], index: 0, kind: input, shape index: {}]
  %s1 = inlined_call_operand.hbm [shape: bf16[256,128], index: 1, kind: input, shape index: {}]
  %s2 = inlined_call_operand.hbm [shape: bf16[128,256], index: 2, kind: input, shape index: {}]
  %s3 = inlined_call_operand.vmem [shape: f32[1,256], index: 3, kind: input, shape index: {}]
  %s4 = inlined_call_operand.vmem [shape: f32[1,128], index: 4, kind: input, shape index: {}]
  %s5 = inlined_call_operand.hbm [shape: f32[2,256,128], index: 5, kind: input, shape index: {}]
  %s6 = inlined_call_operand.hbm [shape: f32[2,256,256], index: 6, kind: input, shape index: {}]
  %s7 = inlined_call_operand.hbm [shape: f32[256,256], index: 7, kind: output, shape index: {}]
  %s8 = sld [smem:[#allocation0]]
  $region81: #{tpu_custom_call.1} parent=0
    _
  %s10 = ssub.s32 1, %s8
  %s11 = scalar_select 0, %s10, %s8
  $region1: #{tpu_custom_call.1} parent=0
    #allocation2 [shape = 'u8[131072]{0}', space=vmem, size = 0x20000, scoped, tag = 'input window, operand 0']
    #allocation3 [shape = 's32[2]{0}', space=sflag, size = 0x8, scoped, tag = 'scoped memory for tpu_custom_call.1']
    #allocation4 [shape = 's32[2]{0}', space=sflag, size = 0x8, scoped, tag = 'scoped memory for tpu_custom_call.1']
    #allocation5 [shape = 'u8[65536]{0}', space=vmem, size = 0x10000, scoped, tag = 'input window, operand 1, single buffered']
    #allocation6 [shape = 's32[1]{0}', space=sflag, size = 0x4, scoped, tag = 'scoped memory for tpu_custom_call.1']
    #allocation7 [shape = 'u8[65536]{0}', space=vmem, size = 0x10000, scoped, tag = 'input window, operand 2, single buffered']
    #allocation8 [shape = 'u8[262144]{0}', space=vmem, size = 0x40000, scoped, tag = 'input window, operand 5']
    #allocation9 [shape = 's32[2]{0}', space=sflag, size = 0x8, scoped, tag = 'scoped memory for tpu_custom_call.1']
    #allocation10 [shape = 'u8[524288]{0}', space=vmem, size = 0x80000, scoped, tag = 'input window, operand 6']
    #allocation11 [shape = 'u8[262144]{0}', space=vmem, size = 0x40000, scoped, tag = 'output window, operand 0']
    %12 = vsyncpa [#allocation3], 0
    %s13 = scalar_lea.sflag [#allocation3], 1
    %14 = vsyncpa %s13, 0
    %15 = vsyncpa [#allocation6], 0
    %16 = vsyncpa [#allocation9], 0
    %s17 = scalar_lea.sflag [#allocation9], 1
    %18 = vsyncpa %s17, 0
    %19 = vsyncpa [#allocation4], 0
    %s20 = scalar_lea.sflag [#allocation4], 1
    %21 = vsyncpa %s20, 0
    loop: start=0, step=1, limit=4
    $region2: #{tpu_custom_call.1} parent=1 // loop_pre_header
      _
    $region3: #{tpu_custom_call.1} parent=1 // loop_header
      %s23 = sphi 0, %s27
      %p24 = scmp.ge.s32.totalorder %s23, 4
      %s33 = sphi 0, %s35
      %s36 = sphi 0, %s33
      %s37 = sphi 0, %s36
      %s53 = sphi 0, %s37
      %s57 = sphi 0, %s57
      %s59 = sphi 0, %s57
      %s60 = sphi 0, %s59
      %s74 = sphi 0, %s60
      %s78 = sphi 0, %s78
      %s80 = sphi 0, %s78
      %s81 = sphi 0, %s80
      %s95 = sphi 0, %s81
      %s99 = sphi 0, %s99
      %s101 = sphi 0, %s99
      %s102 = sphi 0, %s101
      %s116 = sphi 0, %s102
      %s120 = sphi 0, %s120
      %s122 = sphi 0, %s120
      %s123 = sphi 0, %s122
      %s137 = sphi 0, %s123
      %s143 = sphi 0, %s145
      %s146 = sphi 0, %s143
      %s147 = sphi 0, %s146
      %s163 = sphi 0, %s147
      %s169 = sphi 0, %s171
      %s172 = sphi 0, %s169
      %s173 = sphi 0, %s172
      %s189 = sphi 0, %s173
      %s195 = sphi 0, %s197
      %s198 = sphi 0, %s195
      %s199 = sphi 0, %s198
      %s215 = sphi 0, %s199
    $region4: #{tpu_custom_call.1} parent=1 // loop_header_branch
      %26 = sbr.rel (%p24) target = $region8
    $region5: #{tpu_custom_call.1} parent=1 // loop_body
      %s28 = ssub.s32 %s23, 1
      %s29 = ssub.s32 %s23, 2
      %s30 = sadd.s32 %s23, 1
      %s31 = ssub.s32 %s23, %s30
      %p32 = scmp.eq.s32.totalorder %s31, 0
      %s34 = sadd.s32 %s33, 1
      %s35 = scalar_select %p32, %s33, %s34
      %p38 = pneg %p32
      %p39 = scmp.eq.s32.totalorder %s23, 1
      %p40 = por %p38, %p39
      %p41 = scmp.ne.s32.totalorder %s33, %s36
      %p42 = scmp.eq.s32.totalorder %s23, 0
      %p43 = por %p41, %p42
      %p44 = scmp.ne.s32.totalorder %s33, %s36
      %p45 = scmp.eq.s32.totalorder %s28, 1
      %p46 = por %p44, %p45
      %p47 = scmp.ne.s32.totalorder %s36, %s37
      %p48 = scmp.eq.s32.totalorder %s28, 0
      %p49 = por %p47, %p48
      %p50 = scmp.ne.s32.totalorder %s36, %s37
      %p51 = scmp.eq.s32.totalorder %s29, 1
      %p52 = por %p50, %p51
      %p54 = scmp.ne.s32.totalorder %s37, %s53
      %p55 = scmp.eq.s32.totalorder %s29, 0
      %p56 = por %p54, %p55
      %s58 = sadd.s32 %s57, 1
      %p61 = scmp.eq.s32.totalorder %s23, 1
      %p62 = scmp.ne.s32.totalorder %s57, %s59
      %p63 = scmp.eq.s32.totalorder %s23, 0
      %p64 = por %p62, %p63
      %p65 = scmp.ne.s32.totalorder %s57, %s59
      %p66 = scmp.eq.s32.totalorder %s28, 1
      %p67 = por %p65, %p66
      %p68 = scmp.ne.s32.totalorder %s59, %s60
      %p69 = scmp.eq.s32.totalorder %s28, 0
      %p70 = por %p68, %p69
      %p71 = scmp.ne.s32.totalorder %s59, %s60
      %p72 = scmp.eq.s32.totalorder %s29, 1
      %p73 = por %p71, %p72
      %p75 = scmp.ne.s32.totalorder %s60, %s74
      %p76 = scmp.eq.s32.totalorder %s29, 0
      %p77 = por %p75, %p76
      %s79 = sadd.s32 %s78, 1
      %p82 = scmp.eq.s32.totalorder %s23, 1
      %p83 = scmp.ne.s32.totalorder %s78, %s80
      %p84 = scmp.eq.s32.totalorder %s23, 0
      %p85 = por %p83, %p84
      %p86 = scmp.ne.s32.totalorder %s78, %s80
      %p87 = scmp.eq.s32.totalorder %s28, 1
      %p88 = por %p86, %p87
      %p89 = scmp.ne.s32.totalorder %s80, %s81
      %p90 = scmp.eq.s32.totalorder %s28, 0
      %p91 = por %p89, %p90
      %p92 = scmp.ne.s32.totalorder %s80, %s81
      %p93 = scmp.eq.s32.totalorder %s29, 1
      %p94 = por %p92, %p93
      %p96 = scmp.ne.s32.totalorder %s81, %s95
      %p97 = scmp.eq.s32.totalorder %s29, 0
      %p98 = por %p96, %p97
      %s100 = sadd.s32 %s99, 1
      %p103 = scmp.eq.s32.totalorder %s23, 1
      %p104 = scmp.ne.s32.totalorder %s99, %s101
      %p105 = scmp.eq.s32.totalorder %s23, 0
      %p106 = por %p104, %p105
      %p107 = scmp.ne.s32.totalorder %s99, %s101
      %p108 = scmp.eq.s32.totalorder %s28, 1
      %p109 = por %p107, %p108
      %p110 = scmp.ne.s32.totalorder %s101, %s102
      %p111 = scmp.eq.s32.totalorder %s28, 0
      %p112 = por %p110, %p111
      %p113 = scmp.ne.s32.totalorder %s101, %s102
      %p114 = scmp.eq.s32.totalorder %s29, 1
      %p115 = por %p113, %p114
      %p117 = scmp.ne.s32.totalorder %s102, %s116
      %p118 = scmp.eq.s32.totalorder %s29, 0
      %p119 = por %p117, %p118
      %s121 = sadd.s32 %s120, 1
      %p124 = scmp.eq.s32.totalorder %s23, 1
      %p125 = scmp.ne.s32.totalorder %s120, %s122
      %p126 = scmp.eq.s32.totalorder %s23, 0
      %p127 = por %p125, %p126
      %p128 = scmp.ne.s32.totalorder %s120, %s122
      %p129 = scmp.eq.s32.totalorder %s28, 1
      %p130 = por %p128, %p129
      %p131 = scmp.ne.s32.totalorder %s122, %s123
      %p132 = scmp.eq.s32.totalorder %s28, 0
      %p133 = por %p131, %p132
      %p134 = scmp.ne.s32.totalorder %s122, %s123
      %p135 = scmp.eq.s32.totalorder %s29, 1
      %p136 = por %p134, %p135
      %p138 = scmp.ne.s32.totalorder %s123, %s137
      %p139 = scmp.eq.s32.totalorder %s29, 0
      %p140 = por %p138, %p139
      %s141 = ssub.s32 %s23, %s30
      %p142 = scmp.eq.s32.totalorder %s141, 0
      %s144 = sadd.s32 %s143, 1
      %s145 = scalar_select %p142, %s143, %s144
      %p148 = pneg %p142
      %p149 = scmp.eq.s32.totalorder %s23, 1
      %p150 = por %p148, %p149
      %p151 = scmp.ne.s32.totalorder %s143, %s146
      %p152 = scmp.eq.s32.totalorder %s23, 0
      %p153 = por %p151, %p152
      %p154 = scmp.ne.s32.totalorder %s143, %s146
      %p155 = scmp.eq.s32.totalorder %s28, 1
      %p156 = por %p154, %p155
      %p157 = scmp.ne.s32.totalorder %s146, %s147
      %p158 = scmp.eq.s32.totalorder %s28, 0
      %p159 = por %p157, %p158
      %p160 = scmp.ne.s32.totalorder %s146, %s147
      %p161 = scmp.eq.s32.totalorder %s29, 1
      %p162 = por %p160, %p161
      %p164 = scmp.ne.s32.totalorder %s147, %s163
      %p165 = scmp.eq.s32.totalorder %s29, 0
      %p166 = por %p164, %p165
      %s167 = ssub.s32 %s23, %s30
      %p168 = scmp.eq.s32.totalorder %s167, 0
      %s170 = sadd.s32 %s169, 1
      %s171 = scalar_select %p168, %s169, %s170
      %p174 = pneg %p168
      %p175 = scmp.eq.s32.totalorder %s23, 1
      %p176 = por %p174, %p175
      %p177 = scmp.ne.s32.totalorder %s169, %s172
      %p178 = scmp.eq.s32.totalorder %s23, 0
      %p179 = por %p177, %p178
      %p180 = scmp.ne.s32.totalorder %s169, %s172
      %p181 = scmp.eq.s32.totalorder %s28, 1
      %p182 = por %p180, %p181
      %p183 = scmp.ne.s32.totalorder %s172, %s173
      %p184 = scmp.eq.s32.totalorder %s28, 0
      %p185 = por %p183, %p184
      %p186 = scmp.ne.s32.totalorder %s172, %s173
      %p187 = scmp.eq.s32.totalorder %s29, 1
      %p188 = por %p186, %p187
      %p190 = scmp.ne.s32.totalorder %s173, %s189
      %p191 = scmp.eq.s32.totalorder %s29, 0
      %p192 = por %p190, %p191
      %s193 = ssub.s32 %s23, %s30
      %p194 = scmp.eq.s32.totalorder %s193, 0
      %s196 = sadd.s32 %s195, 1
      %s197 = scalar_select %p194, %s195, %s196
      %p200 = pneg %p194
      %p201 = scmp.eq.s32.totalorder %s23, 1
      %p202 = por %p200, %p201
      %p203 = scmp.ne.s32.totalorder %s195, %s198
      %p204 = scmp.eq.s32.totalorder %s23, 0
      %p205 = por %p203, %p204
      %p206 = scmp.ne.s32.totalorder %s195, %s198
      %p207 = scmp.eq.s32.totalorder %s28, 1
      %p208 = por %p206, %p207
      %p209 = scmp.ne.s32.totalorder %s198, %s199
      %p210 = scmp.eq.s32.totalorder %s28, 0
      %p211 = por %p209, %p210
      %p212 = scmp.ne.s32.totalorder %s198, %s199
      %p213 = scmp.eq.s32.totalorder %s29, 1
      %p214 = por %p212, %p213
      %p216 = scmp.ne.s32.totalorder %s199, %s215
      %p217 = scmp.eq.s32.totalorder %s29, 0
      %p218 = por %p216, %p217
      %p219 = scmp.le.s32.totalorder 1, %s23
      %p220 = scmp.lt.s32.totalorder %s23, 3
      %p221 = pnand %p219, %p220
      %p222 = pneg %p221
      // Predicated region
      $region9: #{tpu_custom_call.1} parent=5 // pred_check
        _
      $region10: #{tpu_custom_call.1} parent=5 // pred_check_branch
        %224 = sbr.rel (%p221) target = $region12
      $region11: #{tpu_custom_call.1} parent=5 // pred_region
        %s225 = ssub.s32 %s23, 1
        // Predicated region
        $region13: #{tpu_custom_call.1} parent=11 // pred_check
          %p226 = pneg %p70
        $region14: #{tpu_custom_call.1} parent=11 // pred_check_branch
          %228 = sbr.rel (%p226) target = $region16
        $region15: #{tpu_custom_call.1} parent=11 // pred_region
          %s230 = ssub.s32 2048, 2048
          %231 = vsyncadd [#allocation6], %s230
          %s232 = sshll.u32 [#allocation5], 4
          %s233 = int_to_ptr.vmem [resolvable:$true] %s232
          %238 = dma.hbm_to_vmem [thread:$0]  %s1, 2048, %s233, [#allocation6], 64, 64, 4
        $region16: #{tpu_custom_call.1} parent=11 // pred_fallthru
          _
        // Predicated region
        $region17: #{tpu_custom_call.1} parent=11 // pred_check
          %p239 = pneg %p91
        $region18: #{tpu_custom_call.1} parent=11 // pred_check_branch
          %241 = sbr.rel (%p239) target = $region20
        $region19: #{tpu_custom_call.1} parent=11 // pred_region
          %s243 = ssub.s32 2048, 2048
          %244 = vsyncadd [#allocation6], %s243
          %s245 = sshll.u32 [#allocation7], 4
          %s246 = int_to_ptr.vmem [resolvable:$true] %s245
          %251 = dma.hbm_to_vmem [thread:$0]  %s2, 2048, %s246, [#allocation6], 128, 128, 8
        $region20: #{tpu_custom_call.1} parent=11 // pred_fallthru
          _
        // Predicated region
        $region21: #{tpu_custom_call.1} parent=11 // pred_check
          %p252 = pneg %p112
        $region22: #{tpu_custom_call.1} parent=11 // pred_check_branch
          %254 = sbr.rel (%p252) target = $region24
        $region23: #{tpu_custom_call.1} parent=11 // pred_region
          _
        $region24: #{tpu_custom_call.1} parent=11 // pred_fallthru
          _
        // Predicated region
        $region25: #{tpu_custom_call.1} parent=11 // pred_check
          %p255 = pneg %p133
        $region26: #{tpu_custom_call.1} parent=11 // pred_check_branch
          %257 = sbr.rel (%p255) target = $region28
        $region27: #{tpu_custom_call.1} parent=11 // pred_region
          _
        $region28: #{tpu_custom_call.1} parent=11 // pred_fallthru
          _
      $region12: #{tpu_custom_call.1} parent=5 // pred_fallthru
        _
      %p258 = scmp.lt.s32.totalorder %s23, 2
      // Predicated region
      $region29: #{tpu_custom_call.1} parent=5 // pred_check
        %p259 = pneg %p258
      $region30: #{tpu_custom_call.1} parent=5 // pred_check_branch
        %261 = sbr.rel (%p259) target = $region32
      $region31: #{tpu_custom_call.1} parent=5 // pred_region
        // Predicated region
        $region33: #{tpu_custom_call.1} parent=31 // pred_check
          %p262 = pneg %p43
        $region34: #{tpu_custom_call.1} parent=31 // pred_check_branch
          %264 = sbr.rel (%p262) target = $region36
        $region35: #{tpu_custom_call.1} parent=31 // pred_region
          %s265 = sand.u32 %s33, 1
          %s266 = scalar_lea.sflag [#allocation3], %s265
          %s267 = sand.u32 %s33, 1
          %s268 = smul.addr %s267, 128
          %s269 = scalar_lea.vmem [#allocation2], %s268
          %s270 = smul.u32 16, %s23
          %s272 = ssub.s32 2048, 2048
          %273 = vsyncadd %s266, %s272
          %s274 = smul.addr %s270, 2
          %s275 = smul.addr %s274, 64
          %s276 = scalar_lea.hbm %s0, %s275
          %s277 = sshll.u32 %s269, 4
          %s278 = int_to_ptr.vmem [resolvable:$true] %s277
          %283 = dma.hbm_to_vmem [thread:$0]  %s276, 2048, %s278, %s266, 128, 128, 8
        $region36: #{tpu_custom_call.1} parent=31 // pred_fallthru
          _
        // Predicated region
        $region37: #{tpu_custom_call.1} parent=31 // pred_check
          %p284 = pneg %p153
        $region38: #{tpu_custom_call.1} parent=31 // pred_check_branch
          %286 = sbr.rel (%p284) target = $region40
        $region39: #{tpu_custom_call.1} parent=31 // pred_region
          #allocation13 [shape = 'u32[6]{0}', space=smem, size = 0x18, scoped, tag = 'DMA stride descriptor']
          %s287 = sand.u32 %s23, 1
          %s288 = scalar_lea.sflag [#allocation9], %s287
          %s289 = sand.u32 %s143, 1
          %s290 = smul.addr %s289, 256
          %s291 = scalar_lea.vmem [#allocation8], %s290
          %s292 = smul.u32 16, %s23
          %s294 = ssub.s32 4096, 4096
          %295 = vsyncadd %s288, %s294
          %s296 = smul.addr %s292, 128
          %s297 = scalar_lea.hbm %s5, %s296
          %s299 = sshll.u32 1, 14
          %s300 = sxor.u32 4294967295, %s299
          %s302 = sld [smem:[#allocation0]]
          %s303 = sadd.s32 2, %s302
          %s305 = sshll.u32 7, 26
          %s306 = sxor.u32 4294967295, %s305
          %s307 = sand.u32 0, %s306
          %s308 = sshll.u32 %s303, 26
          %s309 = sor.u32 %s307, %s308
          %s310 = sshll.u32 %s291, 4
          %s311 = int_to_ptr.vmem [resolvable:$true] %s310
          %317 = sst [smem:[#allocation13]] 4096
          %s318 = scalar_lea.smem [#allocation13], 1
          %319 = sst [smem:[%s318]] 2048
          %s320 = scalar_lea.smem [#allocation13], 2
          %321 = sst [smem:[%s320]] 16
          %s322 = scalar_lea.smem [#allocation13], 3
          %323 = sst [smem:[%s322]] 128
          %s324 = scalar_lea.smem [#allocation13], 4
          %325 = sst [smem:[%s324]] 128
          %s326 = scalar_lea.smem [#allocation13], 5
          %327 = sst [smem:[%s326]] 8
          %329 = dma.general %s297, 4096, %s311, %s288, [#allocation12], [#allocation13], %s309, 0
        $region40: #{tpu_custom_call.1} parent=31 // pred_fallthru
          _
        // Predicated region
        $region41: #{tpu_custom_call.1} parent=31 // pred_check
          %p330 = pneg %p179
        $region42: #{tpu_custom_call.1} parent=31 // pred_check_branch
          %332 = sbr.rel (%p330) target = $region44
        $region43: #{tpu_custom_call.1} parent=31 // pred_region
          #allocation15 [shape = 'u32[6]{0}', space=smem, size = 0x18, scoped, tag = 'DMA stride descriptor']
          %s333 = sand.u32 %s23, 1
          %s334 = scalar_lea.sflag [#allocation9], %s333
          %s335 = sand.u32 %s169, 1
          %s336 = smul.addr %s335, 512
          %s337 = scalar_lea.vmem [#allocation10], %s336
          %s338 = smul.u32 16, %s23
          %s340 = ssub.s32 8192, 8192
          %341 = vsyncadd %s334, %s340
          %s342 = smul.addr %s338, 2
          %s343 = smul.addr %s342, 128
          %s344 = scalar_lea.hbm %s6, %s343
          %s346 = sshll.u32 1, 14
          %s347 = sxor.u32 4294967295, %s346
          %s349 = sld [smem:[#allocation0]]
          %s350 = sadd.s32 2, %s349
          %s352 = sshll.u32 7, 26
          %s353 = sxor.u32 4294967295, %s352
          %s354 = sand.u32 0, %s353
          %s355 = sshll.u32 %s350, 26
          %s356 = sor.u32 %s354, %s355
          %s357 = sshll.u32 %s337, 4
          %s358 = int_to_ptr.vmem [resolvable:$true] %s357
          %364 = sst [smem:[#allocation15]] 8192
          %s365 = scalar_lea.smem [#allocation15], 1
          %366 = sst [smem:[%s365]] 4096
          %s367 = scalar_lea.smem [#allocation15], 2
          %368 = sst [smem:[%s367]] 16
          %s369 = scalar_lea.smem [#allocation15], 3
          %370 = sst [smem:[%s369]] 256
          %s371 = scalar_lea.smem [#allocation15], 4
          %372 = sst [smem:[%s371]] 256
          %s373 = scalar_lea.smem [#allocation15], 5
          %374 = sst [smem:[%s373]] 16
          %376 = dma.general %s344, 8192, %s358, %s334, [#allocation14], [#allocation15], %s356, 0
        $region44: #{tpu_custom_call.1} parent=31 // pred_fallthru
          _
      $region32: #{tpu_custom_call.1} parent=5 // pred_fallthru
        _
      %p377 = scmp.le.s32.totalorder 1, %s23
      %p378 = scmp.lt.s32.totalorder %s23, 3
      %p379 = pnand %p377, %p378
      %p380 = pneg %p379
      // Predicated region
      $region45: #{tpu_custom_call.1} parent=5 // pred_check
        _
      $region46: #{tpu_custom_call.1} parent=5 // pred_check_branch
        %382 = sbr.rel (%p379) target = $region48
      $region47: #{tpu_custom_call.1} parent=5 // pred_region
        %s383 = ssub.s32 %s23, 1
        %s384 = sand.u32 %s36, 1
        %s385 = scalar_lea.sflag [#allocation3], %s384
        %s386 = sand.u32 %s36, 1
        %s387 = smul.addr %s386, 128
        %s388 = scalar_lea.vmem [#allocation2], %s387
        // Predicated region
        $region49: #{tpu_custom_call.1} parent=47 // pred_check
          %p389 = pneg %p49
        $region50: #{tpu_custom_call.1} parent=47 // pred_check_branch
          %391 = sbr.rel (%p389) target = $region52
        $region51: #{tpu_custom_call.1} parent=47 // pred_region
          %392 = dma.done %s385, 2048
        $region52: #{tpu_custom_call.1} parent=47 // pred_fallthru
          _
        // Predicated region
        $region53: #{tpu_custom_call.1} parent=47 // pred_check
          %p393 = pneg %p70
        $region54: #{tpu_custom_call.1} parent=47 // pred_check_branch
          %395 = sbr.rel (%p393) target = $region56
        $region55: #{tpu_custom_call.1} parent=47 // pred_region
          %396 = dma.done [#allocation6], 2048
        $region56: #{tpu_custom_call.1} parent=47 // pred_fallthru
          _
        // Predicated region
        $region57: #{tpu_custom_call.1} parent=47 // pred_check
          %p397 = pneg %p91
        $region58: #{tpu_custom_call.1} parent=47 // pred_check_branch
          %399 = sbr.rel (%p397) target = $region60
        $region59: #{tpu_custom_call.1} parent=47 // pred_region
          %400 = dma.done [#allocation6], 2048
        $region60: #{tpu_custom_call.1} parent=47 // pred_fallthru
          _
        %s401 = sand.u32 %s28, 1
        %s402 = scalar_lea.sflag [#allocation9], %s401
        %s403 = sand.u32 %s146, 1
        %s404 = smul.addr %s403, 256
        %s405 = scalar_lea.vmem [#allocation8], %s404
        // Predicated region
        $region61: #{tpu_custom_call.1} parent=47 // pred_check
          %p406 = pneg %p159
        $region62: #{tpu_custom_call.1} parent=47 // pred_check_branch
          %408 = sbr.rel (%p406) target = $region64
        $region63: #{tpu_custom_call.1} parent=47 // pred_region
          %409 = dma.done %s402, 4096
        $region64: #{tpu_custom_call.1} parent=47 // pred_fallthru
          _
        %s410 = sand.u32 %s28, 1
        %s411 = scalar_lea.sflag [#allocation9], %s410
        %s412 = sand.u32 %s172, 1
        %s413 = smul.addr %s412, 512
        %s414 = scalar_lea.vmem [#allocation10], %s413
        // Predicated region
        $region65: #{tpu_custom_call.1} parent=47 // pred_check
          %p415 = pneg %p185
        $region66: #{tpu_custom_call.1} parent=47 // pred_check_branch
          %417 = sbr.rel (%p415) target = $region68
        $region67: #{tpu_custom_call.1} parent=47 // pred_region
          %418 = dma.done %s411, 8192
        $region68: #{tpu_custom_call.1} parent=47 // pred_fallthru
          _
        %s419 = sand.u32 %s36, 1
        %s420 = scalar_lea.sflag [#allocation3], %s419
        %s421 = sand.u32 %s36, 1
        %s422 = smul.addr %s421, 128
        %s423 = scalar_lea.vmem [#allocation2], %s422
        %p424 = pneg %p49
        %p425 = pneg %p46
        %p426 = pneg %p70
        %p427 = pneg %p67
        %p428 = pneg %p91
        %p429 = pneg %p88
        %p430 = pneg %p112
        %p431 = pneg %p109
        %p432 = pneg %p133
        %p433 = pneg %p130
        %s434 = sand.u32 %s28, 1
        %s435 = scalar_lea.sflag [#allocation9], %s434
        %s436 = sand.u32 %s146, 1
        %s437 = smul.addr %s436, 256
        %s438 = scalar_lea.vmem [#allocation8], %s437
        %p439 = pneg %p159
        %p440 = pneg %p156
        %s441 = sand.u32 %s28, 1
        %s442 = scalar_lea.sflag [#allocation9], %s441
        %s443 = sand.u32 %s172, 1
        %s444 = smul.addr %s443, 512
        %s445 = scalar_lea.vmem [#allocation10], %s444
        %p446 = pneg %p185
        %p447 = pneg %p182
        %p448 = pneg %p211
        %p449 = pneg %p208
        %s450 = sand.u32 %s198, 1
        %s451 = scalar_lea.sflag [#allocation4], %s450
        %s452 = sand.u32 %s198, 1
        %s453 = smul.addr %s452, 256
        %s454 = scalar_lea.vmem [#allocation11], %s453
        %s455 = smul.u32 16, %s28
        %s456 = smul.u32 16, %s28
        %s457 = smul.u32 16, %s28
        %s458 = smul.u32 16, %s28
        %v460 = vld [vmem:[#allocation5] sm:$0xf]
        %v461 = vld [vmem:[#allocation5 + $0x4] sm:$0xf]
        %v462 = vld [vmem:[#allocation5 + $0x8] sm:$0xf]
        %v463 = vld [vmem:[#allocation5 + $0xc] sm:$0xf]
        %v464 = vld [vmem:[#allocation5 + $0x10] sm:$0xf]
        %v465 = vld [vmem:[#allocation5 + $0x14] sm:$0xf]
        %v466 = vld [vmem:[#allocation5 + $0x18] sm:$0xf]
        %v467 = vld [vmem:[#allocation5 + $0x1c] sm:$0xf]
        %v468 = vld [vmem:[#allocation5 + $0x20] sm:$0xf]
        %v469 = vld [vmem:[#allocation5 + $0x24] sm:$0xf]
        %v470 = vld [vmem:[#allocation5 + $0x28] sm:$0xf]
        %v471 = vld [vmem:[#allocation5 + $0x2c] sm:$0xf]
        %v472 = vld [vmem:[#allocation5 + $0x30] sm:$0xf]
        %v473 = vld [vmem:[#allocation5 + $0x34] sm:$0xf]
        %v474 = vld [vmem:[#allocation5 + $0x38] sm:$0xf]
        %v475 = vld [vmem:[#allocation5 + $0x3c] sm:$0xf]
        %v476 = vld [vmem:[#allocation5 + $0x40] sm:$0xf]
        %v477 = vld [vmem:[#allocation5 + $0x44] sm:$0xf]
        %v478 = vld [vmem:[#allocation5 + $0x48] sm:$0xf]
        %v479 = vld [vmem:[#allocation5 + $0x4c] sm:$0xf]
        %v480 = vld [vmem:[#allocation5 + $0x50] sm:$0xf]
        %v481 = vld [vmem:[#allocation5 + $0x54] sm:$0xf]
        %v482 = vld [vmem:[#allocation5 + $0x58] sm:$0xf]
        %v483 = vld [vmem:[#allocation5 + $0x5c] sm:$0xf]
        %v484 = vld [vmem:[#allocation5 + $0x60] sm:$0xf]
        %v485 = vld [vmem:[#allocation5 + $0x64] sm:$0xf]
        %v486 = vld [vmem:[#allocation5 + $0x68] sm:$0xf]
        %v487 = vld [vmem:[#allocation5 + $0x6c] sm:$0xf]
        %v488 = vld [vmem:[#allocation5 + $0x70] sm:$0xf]
        %v489 = vld [vmem:[#allocation5 + $0x74] sm:$0xf]
        %v490 = vld [vmem:[#allocation5 + $0x78] sm:$0xf]
        %v491 = vld [vmem:[#allocation5 + $0x7c] sm:$0xf]
        %v492 = vld [vmem:[#allocation7] sm:$0xff]
        %v493 = vld [vmem:[#allocation7 + $0x8] sm:$0xff]
        %v494 = vld [vmem:[#allocation7 + $0x10] sm:$0xff]
        %v495 = vld [vmem:[#allocation7 + $0x18] sm:$0xff]
        %v496 = vld [vmem:[#allocation7 + $0x20] sm:$0xff]
        %v497 = vld [vmem:[#allocation7 + $0x28] sm:$0xff]
        %v498 = vld [vmem:[#allocation7 + $0x30] sm:$0xff]
        %v499 = vld [vmem:[#allocation7 + $0x38] sm:$0xff]
        %v500 = vld [vmem:[#allocation7 + $0x40] sm:$0xff]
        %v501 = vld [vmem:[#allocation7 + $0x48] sm:$0xff]
        %v502 = vld [vmem:[#allocation7 + $0x50] sm:$0xff]
        %v503 = vld [vmem:[#allocation7 + $0x58] sm:$0xff]
        %v504 = vld [vmem:[#allocation7 + $0x60] sm:$0xff]
        %v505 = vld [vmem:[#allocation7 + $0x68] sm:$0xff]
        %v506 = vld [vmem:[#allocation7 + $0x70] sm:$0xff]
        %v507 = vld [vmem:[#allocation7 + $0x78] sm:$0xff]
        %v508 = vld [vmem:[%s4] sm:$0x1]
        %v510 = vlaneseq
        %v511 = vshrl.u32 %v510, 7
        %v512 = vsub.s32 0, %v511
        %v513 = vrot.slane %v508, %v512
        %v515 = vld [vmem:[%s3] sm:$0x3]
        %v517 = vlaneseq
        %v518 = vshrl.u32 %v517, 7
        %v519 = vsub.s32 0, %v518
        %v520 = vrot.slane %v515, %v519
        %v521 = vlaneseq
        %v522 = vshrl.u32 %v521, 7
        %v523 = vsub.s32 1, %v522
        %v524 = vrot.slane %v515, %v523
        %v527 = vld [vmem:[%s388] sm:$0xff]
        %v528 = vld [vmem:[%s388 + $0x8] sm:$0xff]
        %v529 = vld [vmem:[%s388 + $0x10] sm:$0xff]
        %v530 = vld [vmem:[%s388 + $0x18] sm:$0xff]
        %v531 = vld [vmem:[%s388 + $0x20] sm:$0xff]
        %v532 = vld [vmem:[%s388 + $0x28] sm:$0xff]
        %v533 = vld [vmem:[%s388 + $0x30] sm:$0xff]
        %v534 = vld [vmem:[%s388 + $0x38] sm:$0xff]
        %v535 = vld [vmem:[%s388 + $0x40] sm:$0xff]
        %v536 = vld [vmem:[%s388 + $0x48] sm:$0xff]
        %v537 = vld [vmem:[%s388 + $0x50] sm:$0xff]
        %v538 = vld [vmem:[%s388 + $0x58] sm:$0xff]
        %v539 = vld [vmem:[%s388 + $0x60] sm:$0xff]
        %v540 = vld [vmem:[%s388 + $0x68] sm:$0xff]
        %v541 = vld [vmem:[%s388 + $0x70] sm:$0xff]
        %v542 = vld [vmem:[%s388 + $0x78] sm:$0xff]
        %v559 = vunpack.c.l.b16 %v527
        %v560 = vunpack.c.h.b16 %v527
        %v561 = vunpack.c.l.b16 %v528
        %v562 = vunpack.c.h.b16 %v528
        %v563 = vunpack.c.l.b16 %v529
        %v564 = vunpack.c.h.b16 %v529
        %v565 = vunpack.c.l.b16 %v530
        %v566 = vunpack.c.h.b16 %v530
        %v567 = vunpack.c.l.b16 %v531
        %v568 = vunpack.c.h.b16 %v531
        %v569 = vunpack.c.l.b16 %v532
        %v570 = vunpack.c.h.b16 %v532
        %v571 = vunpack.c.l.b16 %v533
        %v572 = vunpack.c.h.b16 %v533
        %v573 = vunpack.c.l.b16 %v534
        %v574 = vunpack.c.h.b16 %v534
        %v575 = vunpack.c.l.b16 %v535
        %v576 = vunpack.c.h.b16 %v535
        %v577 = vunpack.c.l.b16 %v536
        %v578 = vunpack.c.h.b16 %v536
        %v579 = vunpack.c.l.b16 %v537
        %v580 = vunpack.c.h.b16 %v537
        %v581 = vunpack.c.l.b16 %v538
        %v582 = vunpack.c.h.b16 %v538
        %v583 = vunpack.c.l.b16 %v539
        %v584 = vunpack.c.h.b16 %v539
        %v585 = vunpack.c.l.b16 %v540
        %v586 = vunpack.c.h.b16 %v540
        %v587 = vunpack.c.l.b16 %v541
        %v588 = vunpack.c.h.b16 %v541
        %v589 = vunpack.c.l.b16 %v542
        %v590 = vunpack.c.h.b16 %v542
        %v591 = vpack.c.b16 %v561, %v559
        %v592 = vpack.c.b16 %v562, %v560
        %v593 = vpack.c.b16 %v565, %v563
        %v594 = vpack.c.b16 %v566, %v564
        %v595 = vpack.c.b16 %v569, %v567
        %v596 = vpack.c.b16 %v570, %v568
        %v597 = vpack.c.b16 %v573, %v571
        %v598 = vpack.c.b16 %v574, %v572
        %v599 = vpack.c.b16 %v577, %v575
        %v600 = vpack.c.b16 %v578, %v576
        %v601 = vpack.c.b16 %v581, %v579
        %v602 = vpack.c.b16 %v582, %v580
        %v603 = vpack.c.b16 %v585, %v583
        %v604 = vpack.c.b16 %v586, %v584
        %v605 = vpack.c.b16 %v589, %v587
        %v606 = vpack.c.b16 %v590, %v588
        %v655 = vunpack.c.l.b16 %v460
        %v656 = vunpack.c.l.b16 %v461
        %v657 = vunpack.c.l.b16 %v462
        %v658 = vunpack.c.l.b16 %v463
        %v659 = vunpack.c.l.b16 %v464
        %v660 = vunpack.c.l.b16 %v465
        %v661 = vunpack.c.l.b16 %v466
        %v662 = vunpack.c.l.b16 %v467
        %v663 = vunpack.c.l.b16 %v468
        %v664 = vunpack.c.l.b16 %v469
        %v665 = vunpack.c.l.b16 %v470
        %v666 = vunpack.c.l.b16 %v471
        %v667 = vunpack.c.l.b16 %v472
        %v668 = vunpack.c.l.b16 %v473
        %v669 = vunpack.c.l.b16 %v474
        %v670 = vunpack.c.l.b16 %v475
        %v671 = vunpack.c.l.b16 %v476
        %v672 = vunpack.c.l.b16 %v477
        %v673 = vunpack.c.l.b16 %v478
        %v674 = vunpack.c.l.b16 %v479
        %v675 = vunpack.c.l.b16 %v480
        %v676 = vunpack.c.l.b16 %v481
        %v677 = vunpack.c.l.b16 %v482
        %v678 = vunpack.c.l.b16 %v483
        %v679 = vunpack.c.l.b16 %v484
        %v680 = vunpack.c.l.b16 %v485
        %v681 = vunpack.c.l.b16 %v486
        %v682 = vunpack.c.l.b16 %v487
        %v683 = vunpack.c.l.b16 %v488
        %v684 = vunpack.c.l.b16 %v489
        %v685 = vunpack.c.l.b16 %v490
        %v686 = vunpack.c.l.b16 %v491
        %v687 = vpack.c.b16 %v656, %v655
        %v688 = vpack.c.b16 %v658, %v657
        %v689 = vpack.c.b16 %v660, %v659
        %v690 = vpack.c.b16 %v662, %v661
        %v691 = vpack.c.b16 %v664, %v663
        %v692 = vpack.c.b16 %v666, %v665
        %v693 = vpack.c.b16 %v668, %v667
        %v694 = vpack.c.b16 %v670, %v669
        %v695 = vpack.c.b16 %v672, %v671
        %v696 = vpack.c.b16 %v674, %v673
        %v697 = vpack.c.b16 %v676, %v675
        %v698 = vpack.c.b16 %v678, %v677
        %v699 = vpack.c.b16 %v680, %v679
        %v700 = vpack.c.b16 %v682, %v681
        %v701 = vpack.c.b16 %v684, %v683
        %v702 = vpack.c.b16 %v686, %v685
        %719 = vmatprep.subr.bf16.mxu0 0
        %720 = vmatpush1.bf16.msra.mxu0 %v687
        %721 = vmatprep.subr.bf16.mxu0 0
        %722 = vmatpush1.bf16.msra.mxu0 %v688
        %723 = vmatprep.subr.bf16.mxu0 0
        %724 = vmatpush1.bf16.msra.mxu0 %v689
        %725 = vmatprep.subr.bf16.mxu0 0
        %726 = vmatpush1.bf16.msra.mxu0 %v690
        %727 = vmatprep.subr.bf16.mxu0 0
        %728 = vmatpush1.bf16.msra.mxu0 %v691
        %729 = vmatprep.subr.bf16.mxu0 0
        %730 = vmatpush1.bf16.msra.mxu0 %v692
        %731 = vmatprep.subr.bf16.mxu0 0
        %732 = vmatpush1.bf16.msra.mxu0 %v693
        %733 = vmatprep.subr.bf16.mxu0 0
        %734 = vmatpush1.bf16.msra.mxu0 %v694
        %735 = vmatprep.subr.bf16.mxu0 0
        %736 = vmatpush1.bf16.msra.mxu0 %v695
        %737 = vmatprep.subr.bf16.mxu0 0
        %738 = vmatpush1.bf16.msra.mxu0 %v696
        %739 = vmatprep.subr.bf16.mxu0 0
        %740 = vmatpush1.bf16.msra.mxu0 %v697
        %741 = vmatprep.subr.bf16.mxu0 0
        %742 = vmatpush1.bf16.msra.mxu0 %v698
        %743 = vmatprep.subr.bf16.mxu0 0
        %744 = vmatpush1.bf16.msra.mxu0 %v699
        %745 = vmatprep.subr.bf16.mxu0 0
        %746 = vmatpush1.bf16.msra.mxu0 %v700
        %747 = vmatprep.subr.bf16.mxu0 0
        %748 = vmatpush1.bf16.msra.mxu0 %v701
        %749 = vmatprep.subr.bf16.mxu0 0
        %750 = vmatpush1.bf16.msra.mxu0 %v702
        %751 = vmatprep.mubr.bf16.mxu0 %v592
        %752 = vmatmul.mubr.bf16.gmra.mrb[0].mxu0 %v591
        %v753 = vpop.f32.mrb[0].mxu0
        %v754 = vadd.f32 %v513, %v753
        %v755 = vpop.f32.mrb[0].mxu0
        %v756 = vpop.f32.mrb[0].mxu0
        %v757 = vadd.f32 %v513, %v756
        %v758 = vpop.f32.mrb[0].mxu0
        %759 = vmatprep.mubr.bf16.mxu0 %v594
        %760 = vmatmul.mubr.bf16.gmra.mrb[0].mxu0 %v593
        %v761 = vpop.f32.mrb[0].mxu0
        %v762 = vadd.f32 %v513, %v761
        %v763 = vpop.f32.mrb[0].mxu0
        %v764 = vpop.f32.mrb[0].mxu0
        %v765 = vadd.f32 %v513, %v764
        %v766 = vpop.f32.mrb[0].mxu0
        %767 = vmatprep.mubr.bf16.mxu0 %v596
        %768 = vmatmul.mubr.bf16.gmra.mrb[0].mxu0 %v595
        %v769 = vpop.f32.mrb[0].mxu0
        %v770 = vadd.f32 %v513, %v769
        %v771 = vpop.f32.mrb[0].mxu0
        %v772 = vpop.f32.mrb[0].mxu0
        %v773 = vadd.f32 %v513, %v772
        %v774 = vpop.f32.mrb[0].mxu0
        %775 = vmatprep.mubr.bf16.mxu0 %v598
        %776 = vmatmul.mubr.bf16.gmra.mrb[0].mxu0 %v597
        %v777 = vpop.f32.mrb[0].mxu0
        %v778 = vadd.f32 %v513, %v777
        %v779 = vpop.f32.mrb[0].mxu0
        %v780 = vpop.f32.mrb[0].mxu0
        %v781 = vadd.f32 %v513, %v780
        %v782 = vpop.f32.mrb[0].mxu0
        %783 = vmatprep.mubr.bf16.mxu0 %v600
        %784 = vmatmul.mubr.bf16.gmra.mrb[0].mxu0 %v599
        %v785 = vpop.f32.mrb[0].mxu0
        %v786 = vadd.f32 %v513, %v785
        %v787 = vpop.f32.mrb[0].mxu0
        %v788 = vpop.f32.mrb[0].mxu0
        %v789 = vadd.f32 %v513, %v788
        %v790 = vpop.f32.mrb[0].mxu0
        %791 = vmatprep.mubr.bf16.mxu0 %v602
        %792 = vmatmul.mubr.bf16.gmra.mrb[0].mxu0 %v601
        %v793 = vpop.f32.mrb[0].mxu0
        %v794 = vadd.f32 %v513, %v793
        %v795 = vpop.f32.mrb[0].mxu0
        %v796 = vpop.f32.mrb[0].mxu0
        %v797 = vadd.f32 %v513, %v796
        %v798 = vpop.f32.mrb[0].mxu0
        %799 = vmatprep.mubr.bf16.mxu0 %v604
        %800 = vmatmul.mubr.bf16.gmra.mrb[0].mxu0 %v603
        %v801 = vpop.f32.mrb[0].mxu0
        %v802 = vadd.f32 %v513, %v801
        %v803 = vpop.f32.mrb[0].mxu0
        %v804 = vpop.f32.mrb[0].mxu0
        %v805 = vadd.f32 %v513, %v804
        %v806 = vpop.f32.mrb[0].mxu0
        %807 = vmatprep.mubr.bf16.mxu0 %v606
        %808 = vmatmul.mubr.bf16.gmra.mrb[0].mxu0 %v605
        %v809 = vpop.f32.mrb[0].mxu0
        %v810 = vadd.f32 %v513, %v809
        %v811 = vpop.f32.mrb[0].mxu0
        %v812 = vpop.f32.mrb[0].mxu0
        %v813 = vadd.f32 %v513, %v812
        %v814 = vpop.f32.mrb[0].mxu0
        %815 = vdwg.mxu0
        %v816 = vxor.u32 %v754, 2147483648
        %v817 = vxor.u32 %v757, 2147483648
        %v818 = vxor.u32 %v762, 2147483648
        %v819 = vxor.u32 %v765, 2147483648
        %v820 = vxor.u32 %v770, 2147483648
        %v821 = vxor.u32 %v773, 2147483648
        %v822 = vxor.u32 %v778, 2147483648
        %v823 = vxor.u32 %v781, 2147483648
        %v824 = vxor.u32 %v786, 2147483648
        %v825 = vxor.u32 %v789, 2147483648
        %v826 = vxor.u32 %v794, 2147483648
        %v827 = vxor.u32 %v797, 2147483648
        %v828 = vxor.u32 %v802, 2147483648
        %v829 = vxor.u32 %v805, 2147483648
        %v830 = vxor.u32 %v810, 2147483648
        %v831 = vxor.u32 %v813, 2147483648
        %v832 = vmul.f32 %v816, 1.442695
        %v833 = vpow.pop %v832
        %v834 = vmul.f32 %v817, 1.442695
        %v835 = vpow.pop %v834
        %v836 = vmul.f32 %v818, 1.442695
        %v837 = vpow.pop %v836
        %v838 = vmul.f32 %v819, 1.442695
        %v839 = vpow.pop %v838
        %v840 = vmul.f32 %v820, 1.442695
        %v841 = vpow.pop %v840
        %v842 = vmul.f32 %v821, 1.442695
        %v843 = vpow.pop %v842
        %v844 = vmul.f32 %v822, 1.442695
        %v845 = vpow.pop %v844
        %v846 = vmul.f32 %v823, 1.442695
        %v847 = vpow.pop %v846
        %v848 = vmul.f32 %v824, 1.442695
        %v849 = vpow.pop %v848
        %v850 = vmul.f32 %v825, 1.442695
        %v851 = vpow.pop %v850
        %v852 = vmul.f32 %v826, 1.442695
        %v853 = vpow.pop %v852
        %v854 = vmul.f32 %v827, 1.442695
        %v855 = vpow.pop %v854
        %v856 = vmul.f32 %v828, 1.442695
        %v857 = vpow.pop %v856
        %v858 = vmul.f32 %v829, 1.442695
        %v859 = vpow.pop %v858
        %v860 = vmul.f32 %v830, 1.442695
        %v861 = vpow.pop %v860
        %v862 = vmul.f32 %v831, 1.442695
        %v863 = vpow.pop %v862
        %v864 = vadd.f32 %v833, 1.0
        %v865 = vadd.f32 %v835, 1.0
        %v866 = vadd.f32 %v837, 1.0
        %v867 = vadd.f32 %v839, 1.0
        %v868 = vadd.f32 %v841, 1.0
        %v869 = vadd.f32 %v843, 1.0
        %v870 = vadd.f32 %v845, 1.0
        %v871 = vadd.f32 %v847, 1.0
        %v872 = vadd.f32 %v849, 1.0
        %v873 = vadd.f32 %v851, 1.0
        %v874 = vadd.f32 %v853, 1.0
        %v875 = vadd.f32 %v855, 1.0
        %v876 = vadd.f32 %v857, 1.0
        %v877 = vadd.f32 %v859, 1.0
        %v878 = vadd.f32 %v861, 1.0
        %v879 = vadd.f32 %v863, 1.0
        %v880 = vrcp.pop %v864
        %v881 = vmul.f32 1.0, %v880
        %v882 = vrcp.pop %v865
        %v883 = vmul.f32 1.0, %v882
        %v884 = vrcp.pop %v866
        %v885 = vmul.f32 1.0, %v884
        %v886 = vrcp.pop %v867
        %v887 = vmul.f32 1.0, %v886
        %v888 = vrcp.pop %v868
        %v889 = vmul.f32 1.0, %v888
        %v890 = vrcp.pop %v869
        %v891 = vmul.f32 1.0, %v890
        %v892 = vrcp.pop %v870
        %v893 = vmul.f32 1.0, %v892
        %v894 = vrcp.pop %v871
        %v895 = vmul.f32 1.0, %v894
        %v896 = vrcp.pop %v872
        %v897 = vmul.f32 1.0, %v896
        %v898 = vrcp.pop %v873
        %v899 = vmul.f32 1.0, %v898
        %v900 = vrcp.pop %v874
        %v901 = vmul.f32 1.0, %v900
        %v902 = vrcp.pop %v875
        %v903 = vmul.f32 1.0, %v902
        %v904 = vrcp.pop %v876
        %v905 = vmul.f32 1.0, %v904
        %v906 = vrcp.pop %v877
        %v907 = vmul.f32 1.0, %v906
        %v908 = vrcp.pop %v878
        %v909 = vmul.f32 1.0, %v908
        %v910 = vrcp.pop %v879
        %v911 = vmul.f32 1.0, %v910
        %v912 = vld [vmem:[%s405] sm:$0xff]
        %v913 = vld [vmem:[%s405 + $0x8] sm:$0xff]
        %v914 = vld [vmem:[%s405 + $0x10] sm:$0xff]
        %v915 = vld [vmem:[%s405 + $0x18] sm:$0xff]
        %v916 = vld [vmem:[%s405 + $0x20] sm:$0xff]
        %v917 = vld [vmem:[%s405 + $0x28] sm:$0xff]
        %v918 = vld [vmem:[%s405 + $0x30] sm:$0xff]
        %v919 = vld [vmem:[%s405 + $0x38] sm:$0xff]
        %v920 = vld [vmem:[%s405 + $0x40] sm:$0xff]
        %v921 = vld [vmem:[%s405 + $0x48] sm:$0xff]
        %v922 = vld [vmem:[%s405 + $0x50] sm:$0xff]
        %v923 = vld [vmem:[%s405 + $0x58] sm:$0xff]
        %v924 = vld [vmem:[%s405 + $0x60] sm:$0xff]
        %v925 = vld [vmem:[%s405 + $0x68] sm:$0xff]
        %v926 = vld [vmem:[%s405 + $0x70] sm:$0xff]
        %v927 = vld [vmem:[%s405 + $0x78] sm:$0xff]
        %vm928 = vcmp.lt.f32.partialorder %v912, %v881
        %vm929 = vcmp.lt.f32.partialorder %v913, %v883
        %vm930 = vcmp.lt.f32.partialorder %v914, %v885
        %vm931 = vcmp.lt.f32.partialorder %v915, %v887
        %vm932 = vcmp.lt.f32.partialorder %v916, %v889
        %vm933 = vcmp.lt.f32.partialorder %v917, %v891
        %vm934 = vcmp.lt.f32.partialorder %v918, %v893
        %vm935 = vcmp.lt.f32.partialorder %v919, %v895
        %vm936 = vcmp.lt.f32.partialorder %v920, %v897
        %vm937 = vcmp.lt.f32.partialorder %v921, %v899
        %vm938 = vcmp.lt.f32.partialorder %v922, %v901
        %vm939 = vcmp.lt.f32.partialorder %v923, %v903
        %vm940 = vcmp.lt.f32.partialorder %v924, %v905
        %vm941 = vcmp.lt.f32.partialorder %v925, %v907
        %vm942 = vcmp.lt.f32.partialorder %v926, %v909
        %vm943 = vcmp.lt.f32.partialorder %v927, %v911
        %v944 = vsel %vm928, 1, 0
        %v945 = vsel %vm929, 1, 0
        %v946 = vsel %vm930, 1, 0
        %v947 = vsel %vm931, 1, 0
        %v948 = vsel %vm932, 1, 0
        %v949 = vsel %vm933, 1, 0
        %v950 = vsel %vm934, 1, 0
        %v951 = vsel %vm935, 1, 0
        %v952 = vsel %vm936, 1, 0
        %v953 = vsel %vm937, 1, 0
        %v954 = vsel %vm938, 1, 0
        %v955 = vsel %vm939, 1, 0
        %v956 = vsel %vm940, 1, 0
        %v957 = vsel %vm941, 1, 0
        %v958 = vsel %vm942, 1, 0
        %v959 = vsel %vm943, 1, 0
        %v960 = vcvt.s32.f32 %v944
        %v961 = vcvt.s32.f32 %v945
        %v962 = vcvt.s32.f32 %v946
        %v963 = vcvt.s32.f32 %v947
        %v964 = vcvt.s32.f32 %v948
        %v965 = vcvt.s32.f32 %v949
        %v966 = vcvt.s32.f32 %v950
        %v967 = vcvt.s32.f32 %v951
        %v968 = vcvt.s32.f32 %v952
        %v969 = vcvt.s32.f32 %v953
        %v970 = vcvt.s32.f32 %v954
        %v971 = vcvt.s32.f32 %v955
        %v972 = vcvt.s32.f32 %v956
        %v973 = vcvt.s32.f32 %v957
        %v974 = vcvt.s32.f32 %v958
        %v975 = vcvt.s32.f32 %v959
        %v976 = vpack.c.bf16 %v961, %v960
        %v977 = vpack.c.bf16 %v963, %v962
        %v978 = vpack.c.bf16 %v965, %v964
        %v979 = vpack.c.bf16 %v967, %v966
        %v980 = vpack.c.bf16 %v969, %v968
        %v981 = vpack.c.bf16 %v971, %v970
        %v982 = vpack.c.bf16 %v973, %v972
        %v983 = vpack.c.bf16 %v975, %v974
        %v1000 = vunpack.c.l.b16 %v492
        %v1001 = vunpack.c.h.b16 %v492
        %v1002 = vunpack.c.l.b16 %v493
        %v1003 = vunpack.c.h.b16 %v493
        %v1004 = vunpack.c.l.b16 %v494
        %v1005 = vunpack.c.h.b16 %v494
        %v1006 = vunpack.c.l.b16 %v495
        %v1007 = vunpack.c.h.b16 %v495
        %v1008 = vunpack.c.l.b16 %v496
        %v1009 = vunpack.c.h.b16 %v496
        %v1010 = vunpack.c.l.b16 %v497
        %v1011 = vunpack.c.h.b16 %v497
        %v1012 = vunpack.c.l.b16 %v498
        %v1013 = vunpack.c.h.b16 %v498
        %v1014 = vunpack.c.l.b16 %v499
        %v1015 = vunpack.c.h.b16 %v499
        %v1016 = vunpack.c.l.b16 %v500
        %v1017 = vunpack.c.h.b16 %v500
        %v1018 = vunpack.c.l.b16 %v501
        %v1019 = vunpack.c.h.b16 %v501
        %v1020 = vunpack.c.l.b16 %v502
        %v1021 = vunpack.c.h.b16 %v502
        %v1022 = vunpack.c.l.b16 %v503
        %v1023 = vunpack.c.h.b16 %v503
        %v1024 = vunpack.c.l.b16 %v504
        %v1025 = vunpack.c.h.b16 %v504
        %v1026 = vunpack.c.l.b16 %v505
        %v1027 = vunpack.c.h.b16 %v505
        %v1028 = vunpack.c.l.b16 %v506
        %v1029 = vunpack.c.h.b16 %v506
        %v1030 = vunpack.c.l.b16 %v507
        %v1031 = vunpack.c.h.b16 %v507
        %v1032 = vpack.c.b16 %v1002, %v1000
        %v1033 = vpack.c.b16 %v1003, %v1001
        %v1034 = vpack.c.b16 %v1006, %v1004
        %v1035 = vpack.c.b16 %v1007, %v1005
        %v1036 = vpack.c.b16 %v1010, %v1008
        %v1037 = vpack.c.b16 %v1011, %v1009
        %v1038 = vpack.c.b16 %v1014, %v1012
        %v1039 = vpack.c.b16 %v1015, %v1013
        %v1040 = vpack.c.b16 %v1018, %v1016
        %v1041 = vpack.c.b16 %v1019, %v1017
        %v1042 = vpack.c.b16 %v1022, %v1020
        %v1043 = vpack.c.b16 %v1023, %v1021
        %v1044 = vpack.c.b16 %v1026, %v1024
        %v1045 = vpack.c.b16 %v1027, %v1025
        %v1046 = vpack.c.b16 %v1030, %v1028
        %v1047 = vpack.c.b16 %v1031, %v1029
        %1064 = vmatprep.subr.bf16.mxu0 %v1033
        %1065 = vmatpush1.bf16.msra.mxu0 %v1032
        %1066 = vmatprep.subr.bf16.mxu0 %v1035
        %1067 = vmatpush1.bf16.msra.mxu0 %v1034
        %1068 = vmatprep.subr.bf16.mxu0 %v1037
        %1069 = vmatpush1.bf16.msra.mxu0 %v1036
        %1070 = vmatprep.subr.bf16.mxu0 %v1039
        %1071 = vmatpush1.bf16.msra.mxu0 %v1038
        %1072 = vmatprep.subr.bf16.mxu0 %v1041
        %1073 = vmatpush1.bf16.msra.mxu0 %v1040
        %1074 = vmatprep.subr.bf16.mxu0 %v1043
        %1075 = vmatpush1.bf16.msra.mxu0 %v1042
        %1076 = vmatprep.subr.bf16.mxu0 %v1045
        %1077 = vmatpush1.bf16.msra.mxu0 %v1044
        %1078 = vmatprep.subr.bf16.mxu0 %v1047
        %1079 = vmatpush1.bf16.msra.mxu0 %v1046
        %1080 = vmatprep.subr.bf16.mxu0 0
        %1081 = vmatpush1.bf16.msra.mxu0 0
        %1082 = vmatprep.subr.bf16.mxu0 0
        %1083 = vmatpush1.bf16.msra.mxu0 0
        %1084 = vmatprep.subr.bf16.mxu0 0
        %1085 = vmatpush1.bf16.msra.mxu0 0
        %1086 = vmatprep.subr.bf16.mxu0 0
        %1087 = vmatpush1.bf16.msra.mxu0 0
        %1088 = vmatprep.subr.bf16.mxu0 0
        %1089 = vmatpush1.bf16.msra.mxu0 0
        %1090 = vmatprep.subr.bf16.mxu0 0
        %1091 = vmatpush1.bf16.msra.mxu0 0
        %1092 = vmatprep.subr.bf16.mxu0 0
        %1093 = vmatpush1.bf16.msra.mxu0 0
        %1094 = vmatprep.subr.bf16.mxu0 0
        %1095 = vmatpush1.bf16.msra.mxu0 0
        %1096 = vmatprep.mubr.bf16.mxu0 0
        %1097 = vmatmul.mubr.bf16.gmra.mrb[0].mxu0 %v976
        %v1098 = vpop.f32.mrb[0].mxu0
        %v1099 = vadd.f32 %v520, %v1098
        %v1100 = vpop.f32.mrb[0].mxu0
        %v1101 = vadd.f32 %v524, %v1100
        %v1102 = vpop.f32.mrb[0].mxu0
        %v1103 = vadd.f32 %v520, %v1102
        %v1104 = vpop.f32.mrb[0].mxu0
        %v1105 = vadd.f32 %v524, %v1104
        %1106 = vmatprep.mubr.bf16.mxu0 0
        %1107 = vmatmul.mubr.bf16.gmra.mrb[0].mxu0 %v977
        %v1108 = vpop.f32.mrb[0].mxu0
        %v1109 = vadd.f32 %v520, %v1108
        %v1110 = vpop.f32.mrb[0].mxu0
        %v1111 = vadd.f32 %v524, %v1110
        %v1112 = vpop.f32.mrb[0].mxu0
        %v1113 = vadd.f32 %v520, %v1112
        %v1114 = vpop.f32.mrb[0].mxu0
        %v1115 = vadd.f32 %v524, %v1114
        %1116 = vmatprep.mubr.bf16.mxu0 0
        %1117 = vmatmul.mubr.bf16.gmra.mrb[0].mxu0 %v978
        %v1118 = vpop.f32.mrb[0].mxu0
        %v1119 = vadd.f32 %v520, %v1118
        %v1120 = vpop.f32.mrb[0].mxu0
        %v1121 = vadd.f32 %v524, %v1120
        %v1122 = vpop.f32.mrb[0].mxu0
        %v1123 = vadd.f32 %v520, %v1122
        %v1124 = vpop.f32.mrb[0].mxu0
        %v1125 = vadd.f32 %v524, %v1124
        %1126 = vmatprep.mubr.bf16.mxu0 0
        %1127 = vmatmul.mubr.bf16.gmra.mrb[0].mxu0 %v979
        %v1128 = vpop.f32.mrb[0].mxu0
        %v1129 = vadd.f32 %v520, %v1128
        %v1130 = vpop.f32.mrb[0].mxu0
        %v1131 = vadd.f32 %v524, %v1130
        %v1132 = vpop.f32.mrb[0].mxu0
        %v1133 = vadd.f32 %v520, %v1132
        %v1134 = vpop.f32.mrb[0].mxu0
        %v1135 = vadd.f32 %v524, %v1134
        %1136 = vmatprep.mubr.bf16.mxu0 0
        %1137 = vmatmul.mubr.bf16.gmra.mrb[0].mxu0 %v980
        %v1138 = vpop.f32.mrb[0].mxu0
        %v1139 = vadd.f32 %v520, %v1138
        %v1140 = vpop.f32.mrb[0].mxu0
        %v1141 = vadd.f32 %v524, %v1140
        %v1142 = vpop.f32.mrb[0].mxu0
        %v1143 = vadd.f32 %v520, %v1142
        %v1144 = vpop.f32.mrb[0].mxu0
        %v1145 = vadd.f32 %v524, %v1144
        %1146 = vmatprep.mubr.bf16.mxu0 0
        %1147 = vmatmul.mubr.bf16.gmra.mrb[0].mxu0 %v981
        %v1148 = vpop.f32.mrb[0].mxu0
        %v1149 = vadd.f32 %v520, %v1148
        %v1150 = vpop.f32.mrb[0].mxu0
        %v1151 = vadd.f32 %v524, %v1150
        %v1152 = vpop.f32.mrb[0].mxu0
        %v1153 = vadd.f32 %v520, %v1152
        %v1154 = vpop.f32.mrb[0].mxu0
        %v1155 = vadd.f32 %v524, %v1154
        %1156 = vmatprep.mubr.bf16.mxu0 0
        %1157 = vmatmul.mubr.bf16.gmra.mrb[0].mxu0 %v982
        %v1158 = vpop.f32.mrb[0].mxu0
        %v1159 = vadd.f32 %v520, %v1158
        %v1160 = vpop.f32.mrb[0].mxu0
        %v1161 = vadd.f32 %v524, %v1160
        %v1162 = vpop.f32.mrb[0].mxu0
        %v1163 = vadd.f32 %v520, %v1162
        %v1164 = vpop.f32.mrb[0].mxu0
        %v1165 = vadd.f32 %v524, %v1164
        %1166 = vmatprep.mubr.bf16.mxu0 0
        %1167 = vmatmul.mubr.bf16.gmra.mrb[0].mxu0 %v983
        %v1168 = vpop.f32.mrb[0].mxu0
        %v1169 = vadd.f32 %v520, %v1168
        %v1170 = vpop.f32.mrb[0].mxu0
        %v1171 = vadd.f32 %v524, %v1170
        %v1172 = vpop.f32.mrb[0].mxu0
        %v1173 = vadd.f32 %v520, %v1172
        %v1174 = vpop.f32.mrb[0].mxu0
        %v1175 = vadd.f32 %v524, %v1174
        %1176 = vdwg.mxu0
        %v1177 = vxor.u32 %v1099, 2147483648
        %v1178 = vxor.u32 %v1101, 2147483648
        %v1179 = vxor.u32 %v1103, 2147483648
        %v1180 = vxor.u32 %v1105, 2147483648
        %v1181 = vxor.u32 %v1109, 2147483648
        %v1182 = vxor.u32 %v1111, 2147483648
        %v1183 = vxor.u32 %v1113, 2147483648
        %v1184 = vxor.u32 %v1115, 2147483648
        %v1185 = vxor.u32 %v1119, 2147483648
        %v1186 = vxor.u32 %v1121, 2147483648
        %v1187 = vxor.u32 %v1123, 2147483648
        %v1188 = vxor.u32 %v1125, 2147483648
        %v1189 = vxor.u32 %v1129, 2147483648
        %v1190 = vxor.u32 %v1131, 2147483648
        %v1191 = vxor.u32 %v1133, 2147483648
        %v1192 = vxor.u32 %v1135, 2147483648
        %v1193 = vxor.u32 %v1139, 2147483648
        %v1194 = vxor.u32 %v1141, 2147483648
        %v1195 = vxor.u32 %v1143, 2147483648
        %v1196 = vxor.u32 %v1145, 2147483648
        %v1197 = vxor.u32 %v1149, 2147483648
        %v1198 = vxor.u32 %v1151, 2147483648
        %v1199 = vxor.u32 %v1153, 2147483648
        %v1200 = vxor.u32 %v1155, 2147483648
        %v1201 = vxor.u32 %v1159, 2147483648
        %v1202 = vxor.u32 %v1161, 2147483648
        %v1203 = vxor.u32 %v1163, 2147483648
        %v1204 = vxor.u32 %v1165, 2147483648
        %v1205 = vxor.u32 %v1169, 2147483648
        %v1206 = vxor.u32 %v1171, 2147483648
        %v1207 = vxor.u32 %v1173, 2147483648
        %v1208 = vxor.u32 %v1175, 2147483648
        %v1209 = vmul.f32 %v1177, 1.442695
        %v1210 = vpow.pop %v1209
        %v1211 = vmul.f32 %v1178, 1.442695
        %v1212 = vpow.pop %v1211
        %v1213 = vmul.f32 %v1179, 1.442695
        %v1214 = vpow.pop %v1213
        %v1215 = vmul.f32 %v1180, 1.442695
        %v1216 = vpow.pop %v1215
        %v1217 = vmul.f32 %v1181, 1.442695
        %v1218 = vpow.pop %v1217
        %v1219 = vmul.f32 %v1182, 1.442695
        %v1220 = vpow.pop %v1219
        %v1221 = vmul.f32 %v1183, 1.442695
        %v1222 = vpow.pop %v1221
        %v1223 = vmul.f32 %v1184, 1.442695
        %v1224 = vpow.pop %v1223
        %v1225 = vmul.f32 %v1185, 1.442695
        %v1226 = vpow.pop %v1225
        %v1227 = vmul.f32 %v1186, 1.442695
        %v1228 = vpow.pop %v1227
        %v1229 = vmul.f32 %v1187, 1.442695
        %v1230 = vpow.pop %v1229
        %v1231 = vmul.f32 %v1188, 1.442695
        %v1232 = vpow.pop %v1231
        %v1233 = vmul.f32 %v1189, 1.442695
        %v1234 = vpow.pop %v1233
        %v1235 = vmul.f32 %v1190, 1.442695
        %v1236 = vpow.pop %v1235
        %v1237 = vmul.f32 %v1191, 1.442695
        %v1238 = vpow.pop %v1237
        %v1239 = vmul.f32 %v1192, 1.442695
        %v1240 = vpow.pop %v1239
        %v1241 = vmul.f32 %v1193, 1.442695
        %v1242 = vpow.pop %v1241
        %v1243 = vmul.f32 %v1194, 1.442695
        %v1244 = vpow.pop %v1243
        %v1245 = vmul.f32 %v1195, 1.442695
        %v1246 = vpow.pop %v1245
        %v1247 = vmul.f32 %v1196, 1.442695
        %v1248 = vpow.pop %v1247
        %v1249 = vmul.f32 %v1197, 1.442695
        %v1250 = vpow.pop %v1249
        %v1251 = vmul.f32 %v1198, 1.442695
        %v1252 = vpow.pop %v1251
        %v1253 = vmul.f32 %v1199, 1.442695
        %v1254 = vpow.pop %v1253
        %v1255 = vmul.f32 %v1200, 1.442695
        %v1256 = vpow.pop %v1255
        %v1257 = vmul.f32 %v1201, 1.442695
        %v1258 = vpow.pop %v1257
        %v1259 = vmul.f32 %v1202, 1.442695
        %v1260 = vpow.pop %v1259
        %v1261 = vmul.f32 %v1203, 1.442695
        %v1262 = vpow.pop %v1261
        %v1263 = vmul.f32 %v1204, 1.442695
        %v1264 = vpow.pop %v1263
        %v1265 = vmul.f32 %v1205, 1.442695
        %v1266 = vpow.pop %v1265
        %v1267 = vmul.f32 %v1206, 1.442695
        %v1268 = vpow.pop %v1267
        %v1269 = vmul.f32 %v1207, 1.442695
        %v1270 = vpow.pop %v1269
        %v1271 = vmul.f32 %v1208, 1.442695
        %v1272 = vpow.pop %v1271
        %v1273 = vadd.f32 %v1210, 1.0
        %v1274 = vadd.f32 %v1212, 1.0
        %v1275 = vadd.f32 %v1214, 1.0
        %v1276 = vadd.f32 %v1216, 1.0
        %v1277 = vadd.f32 %v1218, 1.0
        %v1278 = vadd.f32 %v1220, 1.0
        %v1279 = vadd.f32 %v1222, 1.0
        %v1280 = vadd.f32 %v1224, 1.0
        %v1281 = vadd.f32 %v1226, 1.0
        %v1282 = vadd.f32 %v1228, 1.0
        %v1283 = vadd.f32 %v1230, 1.0
        %v1284 = vadd.f32 %v1232, 1.0
        %v1285 = vadd.f32 %v1234, 1.0
        %v1286 = vadd.f32 %v1236, 1.0
        %v1287 = vadd.f32 %v1238, 1.0
        %v1288 = vadd.f32 %v1240, 1.0
        %v1289 = vadd.f32 %v1242, 1.0
        %v1290 = vadd.f32 %v1244, 1.0
        %v1291 = vadd.f32 %v1246, 1.0
        %v1292 = vadd.f32 %v1248, 1.0
        %v1293 = vadd.f32 %v1250, 1.0
        %v1294 = vadd.f32 %v1252, 1.0
        %v1295 = vadd.f32 %v1254, 1.0
        %v1296 = vadd.f32 %v1256, 1.0
        %v1297 = vadd.f32 %v1258, 1.0
        %v1298 = vadd.f32 %v1260, 1.0
        %v1299 = vadd.f32 %v1262, 1.0
        %v1300 = vadd.f32 %v1264, 1.0
        %v1301 = vadd.f32 %v1266, 1.0
        %v1302 = vadd.f32 %v1268, 1.0
        %v1303 = vadd.f32 %v1270, 1.0
        %v1304 = vadd.f32 %v1272, 1.0
        %v1305 = vrcp.pop %v1273
        %v1306 = vmul.f32 1.0, %v1305
        %v1307 = vrcp.pop %v1274
        %v1308 = vmul.f32 1.0, %v1307
        %v1309 = vrcp.pop %v1275
        %v1310 = vmul.f32 1.0, %v1309
        %v1311 = vrcp.pop %v1276
        %v1312 = vmul.f32 1.0, %v1311
        %v1313 = vrcp.pop %v1277
        %v1314 = vmul.f32 1.0, %v1313
        %v1315 = vrcp.pop %v1278
        %v1316 = vmul.f32 1.0, %v1315
        %v1317 = vrcp.pop %v1279
        %v1318 = vmul.f32 1.0, %v1317
        %v1319 = vrcp.pop %v1280
        %v1320 = vmul.f32 1.0, %v1319
        %v1321 = vrcp.pop %v1281
        %v1322 = vmul.f32 1.0, %v1321
        %v1323 = vrcp.pop %v1282
        %v1324 = vmul.f32 1.0, %v1323
        %v1325 = vrcp.pop %v1283
        %v1326 = vmul.f32 1.0, %v1325
        %v1327 = vrcp.pop %v1284
        %v1328 = vmul.f32 1.0, %v1327
        %v1329 = vrcp.pop %v1285
        %v1330 = vmul.f32 1.0, %v1329
        %v1331 = vrcp.pop %v1286
        %v1332 = vmul.f32 1.0, %v1331
        %v1333 = vrcp.pop %v1287
        %v1334 = vmul.f32 1.0, %v1333
        %v1335 = vrcp.pop %v1288
        %v1336 = vmul.f32 1.0, %v1335
        %v1337 = vrcp.pop %v1289
        %v1338 = vmul.f32 1.0, %v1337
        %v1339 = vrcp.pop %v1290
        %v1340 = vmul.f32 1.0, %v1339
        %v1341 = vrcp.pop %v1291
        %v1342 = vmul.f32 1.0, %v1341
        %v1343 = vrcp.pop %v1292
        %v1344 = vmul.f32 1.0, %v1343
        %v1345 = vrcp.pop %v1293
        %v1346 = vmul.f32 1.0, %v1345
        %v1347 = vrcp.pop %v1294
        %v1348 = vmul.f32 1.0, %v1347
        %v1349 = vrcp.pop %v1295
        %v1350 = vmul.f32 1.0, %v1349
        %v1351 = vrcp.pop %v1296
        %v1352 = vmul.f32 1.0, %v1351
        %v1353 = vrcp.pop %v1297
        %v1354 = vmul.f32 1.0, %v1353
        %v1355 = vrcp.pop %v1298
        %v1356 = vmul.f32 1.0, %v1355
        %v1357 = vrcp.pop %v1299
        %v1358 = vmul.f32 1.0, %v1357
        %v1359 = vrcp.pop %v1300
        %v1360 = vmul.f32 1.0, %v1359
        %v1361 = vrcp.pop %v1301
        %v1362 = vmul.f32 1.0, %v1361
        %v1363 = vrcp.pop %v1302
        %v1364 = vmul.f32 1.0, %v1363
        %v1365 = vrcp.pop %v1303
        %v1366 = vmul.f32 1.0, %v1365
        %v1367 = vrcp.pop %v1304
        %v1368 = vmul.f32 1.0, %v1367
        %v1369 = vld [vmem:[%s414] sm:$0xff]
        %v1370 = vld [vmem:[%s414 + $0x8] sm:$0xff]
        %v1371 = vld [vmem:[%s414 + $0x10] sm:$0xff]
        %v1372 = vld [vmem:[%s414 + $0x18] sm:$0xff]
        %v1373 = vld [vmem:[%s414 + $0x20] sm:$0xff]
        %v1374 = vld [vmem:[%s414 + $0x28] sm:$0xff]
        %v1375 = vld [vmem:[%s414 + $0x30] sm:$0xff]
        %v1376 = vld [vmem:[%s414 + $0x38] sm:$0xff]
        %v1377 = vld [vmem:[%s414 + $0x40] sm:$0xff]
        %v1378 = vld [vmem:[%s414 + $0x48] sm:$0xff]
        %v1379 = vld [vmem:[%s414 + $0x50] sm:$0xff]
        %v1380 = vld [vmem:[%s414 + $0x58] sm:$0xff]
        %v1381 = vld [vmem:[%s414 + $0x60] sm:$0xff]
        %v1382 = vld [vmem:[%s414 + $0x68] sm:$0xff]
        %v1383 = vld [vmem:[%s414 + $0x70] sm:$0xff]
        %v1384 = vld [vmem:[%s414 + $0x78] sm:$0xff]
        %v1385 = vld [vmem:[%s414 + $0x80] sm:$0xff]
        %v1386 = vld [vmem:[%s414 + $0x88] sm:$0xff]
        %v1387 = vld [vmem:[%s414 + $0x90] sm:$0xff]
        %v1388 = vld [vmem:[%s414 + $0x98] sm:$0xff]
        %v1389 = vld [vmem:[%s414 + $0xa0] sm:$0xff]
        %v1390 = vld [vmem:[%s414 + $0xa8] sm:$0xff]
        %v1391 = vld [vmem:[%s414 + $0xb0] sm:$0xff]
        %v1392 = vld [vmem:[%s414 + $0xb8] sm:$0xff]
        %v1393 = vld [vmem:[%s414 + $0xc0] sm:$0xff]
        %v1394 = vld [vmem:[%s414 + $0xc8] sm:$0xff]
        %v1395 = vld [vmem:[%s414 + $0xd0] sm:$0xff]
        %v1396 = vld [vmem:[%s414 + $0xd8] sm:$0xff]
        %v1397 = vld [vmem:[%s414 + $0xe0] sm:$0xff]
        %v1398 = vld [vmem:[%s414 + $0xe8] sm:$0xff]
        %v1399 = vld [vmem:[%s414 + $0xf0] sm:$0xff]
        %v1400 = vld [vmem:[%s414 + $0xf8] sm:$0xff]
        %vm1401 = vcmp.lt.f32.partialorder %v1369, %v1306
        %vm1402 = vcmp.lt.f32.partialorder %v1370, %v1308
        %vm1403 = vcmp.lt.f32.partialorder %v1371, %v1310
        %vm1404 = vcmp.lt.f32.partialorder %v1372, %v1312
        %vm1405 = vcmp.lt.f32.partialorder %v1373, %v1314
        %vm1406 = vcmp.lt.f32.partialorder %v1374, %v1316
        %vm1407 = vcmp.lt.f32.partialorder %v1375, %v1318
        %vm1408 = vcmp.lt.f32.partialorder %v1376, %v1320
        %vm1409 = vcmp.lt.f32.partialorder %v1377, %v1322
        %vm1410 = vcmp.lt.f32.partialorder %v1378, %v1324
        %vm1411 = vcmp.lt.f32.partialorder %v1379, %v1326
        %vm1412 = vcmp.lt.f32.partialorder %v1380, %v1328
        %vm1413 = vcmp.lt.f32.partialorder %v1381, %v1330
        %vm1414 = vcmp.lt.f32.partialorder %v1382, %v1332
        %vm1415 = vcmp.lt.f32.partialorder %v1383, %v1334
        %vm1416 = vcmp.lt.f32.partialorder %v1384, %v1336
        %vm1417 = vcmp.lt.f32.partialorder %v1385, %v1338
        %vm1418 = vcmp.lt.f32.partialorder %v1386, %v1340
        %vm1419 = vcmp.lt.f32.partialorder %v1387, %v1342
        %vm1420 = vcmp.lt.f32.partialorder %v1388, %v1344
        %vm1421 = vcmp.lt.f32.partialorder %v1389, %v1346
        %vm1422 = vcmp.lt.f32.partialorder %v1390, %v1348
        %vm1423 = vcmp.lt.f32.partialorder %v1391, %v1350
        %vm1424 = vcmp.lt.f32.partialorder %v1392, %v1352
        %vm1425 = vcmp.lt.f32.partialorder %v1393, %v1354
        %vm1426 = vcmp.lt.f32.partialorder %v1394, %v1356
        %vm1427 = vcmp.lt.f32.partialorder %v1395, %v1358
        %vm1428 = vcmp.lt.f32.partialorder %v1396, %v1360
        %vm1429 = vcmp.lt.f32.partialorder %v1397, %v1362
        %vm1430 = vcmp.lt.f32.partialorder %v1398, %v1364
        %vm1431 = vcmp.lt.f32.partialorder %v1399, %v1366
        %vm1432 = vcmp.lt.f32.partialorder %v1400, %v1368
        %v1433 = vsel %vm1401, 1, 0
        %v1434 = vsel %vm1402, 1, 0
        %v1435 = vsel %vm1403, 1, 0
        %v1436 = vsel %vm1404, 1, 0
        %v1437 = vsel %vm1405, 1, 0
        %v1438 = vsel %vm1406, 1, 0
        %v1439 = vsel %vm1407, 1, 0
        %v1440 = vsel %vm1408, 1, 0
        %v1441 = vsel %vm1409, 1, 0
        %v1442 = vsel %vm1410, 1, 0
        %v1443 = vsel %vm1411, 1, 0
        %v1444 = vsel %vm1412, 1, 0
        %v1445 = vsel %vm1413, 1, 0
        %v1446 = vsel %vm1414, 1, 0
        %v1447 = vsel %vm1415, 1, 0
        %v1448 = vsel %vm1416, 1, 0
        %v1449 = vsel %vm1417, 1, 0
        %v1450 = vsel %vm1418, 1, 0
        %v1451 = vsel %vm1419, 1, 0
        %v1452 = vsel %vm1420, 1, 0
        %v1453 = vsel %vm1421, 1, 0
        %v1454 = vsel %vm1422, 1, 0
        %v1455 = vsel %vm1423, 1, 0
        %v1456 = vsel %vm1424, 1, 0
        %v1457 = vsel %vm1425, 1, 0
        %v1458 = vsel %vm1426, 1, 0
        %v1459 = vsel %vm1427, 1, 0
        %v1460 = vsel %vm1428, 1, 0
        %v1461 = vsel %vm1429, 1, 0
        %v1462 = vsel %vm1430, 1, 0
        %v1463 = vsel %vm1431, 1, 0
        %v1464 = vsel %vm1432, 1, 0
        %v1465 = vcvt.s32.f32 %v1433
        %v1466 = vcvt.s32.f32 %v1434
        %v1467 = vcvt.s32.f32 %v1435
        %v1468 = vcvt.s32.f32 %v1436
        %v1469 = vcvt.s32.f32 %v1437
        %v1470 = vcvt.s32.f32 %v1438
        %v1471 = vcvt.s32.f32 %v1439
        %v1472 = vcvt.s32.f32 %v1440
        %v1473 = vcvt.s32.f32 %v1441
        %v1474 = vcvt.s32.f32 %v1442
        %v1475 = vcvt.s32.f32 %v1443
        %v1476 = vcvt.s32.f32 %v1444
        %v1477 = vcvt.s32.f32 %v1445
        %v1478 = vcvt.s32.f32 %v1446
        %v1479 = vcvt.s32.f32 %v1447
        %v1480 = vcvt.s32.f32 %v1448
        %v1481 = vcvt.s32.f32 %v1449
        %v1482 = vcvt.s32.f32 %v1450
        %v1483 = vcvt.s32.f32 %v1451
        %v1484 = vcvt.s32.f32 %v1452
        %v1485 = vcvt.s32.f32 %v1453
        %v1486 = vcvt.s32.f32 %v1454
        %v1487 = vcvt.s32.f32 %v1455
        %v1488 = vcvt.s32.f32 %v1456
        %v1489 = vcvt.s32.f32 %v1457
        %v1490 = vcvt.s32.f32 %v1458
        %v1491 = vcvt.s32.f32 %v1459
        %v1492 = vcvt.s32.f32 %v1460
        %v1493 = vcvt.s32.f32 %v1461
        %v1494 = vcvt.s32.f32 %v1462
        %v1495 = vcvt.s32.f32 %v1463
        %v1496 = vcvt.s32.f32 %v1464
        %v1497 = vpack.c.bf16 %v1467, %v1465
        %v1498 = vpack.c.bf16 %v1468, %v1466
        %v1499 = vpack.c.bf16 %v1471, %v1469
        %v1500 = vpack.c.bf16 %v1472, %v1470
        %v1501 = vpack.c.bf16 %v1475, %v1473
        %v1502 = vpack.c.bf16 %v1476, %v1474
        %v1503 = vpack.c.bf16 %v1479, %v1477
        %v1504 = vpack.c.bf16 %v1480, %v1478
        %v1505 = vpack.c.bf16 %v1483, %v1481
        %v1506 = vpack.c.bf16 %v1484, %v1482
        %v1507 = vpack.c.bf16 %v1487, %v1485
        %v1508 = vpack.c.bf16 %v1488, %v1486
        %v1509 = vpack.c.bf16 %v1491, %v1489
        %v1510 = vpack.c.bf16 %v1492, %v1490
        %v1511 = vpack.c.bf16 %v1495, %v1493
        %v1512 = vpack.c.bf16 %v1496, %v1494
        %1513 = vmatprep.subr.bf16.mxu0 0
        %1514 = vmatpush1.bf16.msra.mxu0 %v687
        %1515 = vmatprep.subr.bf16.mxu0 0
        %1516 = vmatpush1.bf16.msra.mxu0 %v688
        %1517 = vmatprep.subr.bf16.mxu0 0
        %1518 = vmatpush1.bf16.msra.mxu0 %v689
        %1519 = vmatprep.subr.bf16.mxu0 0
        %1520 = vmatpush1.bf16.msra.mxu0 %v690
        %1521 = vmatprep.subr.bf16.mxu0 0
        %1522 = vmatpush1.bf16.msra.mxu0 %v691
        %1523 = vmatprep.subr.bf16.mxu0 0
        %1524 = vmatpush1.bf16.msra.mxu0 %v692
        %1525 = vmatprep.subr.bf16.mxu0 0
        %1526 = vmatpush1.bf16.msra.mxu0 %v693
        %1527 = vmatprep.subr.bf16.mxu0 0
        %1528 = vmatpush1.bf16.msra.mxu0 %v694
        %1529 = vmatprep.subr.bf16.mxu0 0
        %1530 = vmatpush1.bf16.msra.mxu0 %v695
        %1531 = vmatprep.subr.bf16.mxu0 0
        %1532 = vmatpush1.bf16.msra.mxu0 %v696
        %1533 = vmatprep.subr.bf16.mxu0 0
        %1534 = vmatpush1.bf16.msra.mxu0 %v697
        %1535 = vmatprep.subr.bf16.mxu0 0
        %1536 = vmatpush1.bf16.msra.mxu0 %v698
        %1537 = vmatprep.subr.bf16.mxu0 0
        %1538 = vmatpush1.bf16.msra.mxu0 %v699
        %1539 = vmatprep.subr.bf16.mxu0 0
        %1540 = vmatpush1.bf16.msra.mxu0 %v700
        %1541 = vmatprep.subr.bf16.mxu0 0
        %1542 = vmatpush1.bf16.msra.mxu0 %v701
        %1543 = vmatprep.subr.bf16.mxu0 0
        %1544 = vmatpush1.bf16.msra.mxu0 %v702
        %1545 = vmatprep.mubr.bf16.mxu0 %v1498
        %1546 = vmatmul.mubr.bf16.gmra.mrb[0].mxu0 %v1497
        %v1547 = vpop.f32.mrb[0].mxu0
        %v1548 = vadd.f32 %v513, %v1547
        %v1549 = vpop.f32.mrb[0].mxu0
        %v1550 = vpop.f32.mrb[0].mxu0
        %v1551 = vadd.f32 %v513, %v1550
        %v1552 = vpop.f32.mrb[0].mxu0
        %1553 = vmatprep.mubr.bf16.mxu0 %v1500
        %1554 = vmatmul.mubr.bf16.gmra.mrb[0].mxu0 %v1499
        %v1555 = vpop.f32.mrb[0].mxu0
        %v1556 = vadd.f32 %v513, %v1555
        %v1557 = vpop.f32.mrb[0].mxu0
        %v1558 = vpop.f32.mrb[0].mxu0
        %v1559 = vadd.f32 %v513, %v1558
        %v1560 = vpop.f32.mrb[0].mxu0
        %1561 = vmatprep.mubr.bf16.mxu0 %v1502
        %1562 = vmatmul.mubr.bf16.gmra.mrb[0].mxu0 %v1501
        %v1563 = vpop.f32.mrb[0].mxu0
        %v1564 = vadd.f32 %v513, %v1563
        %v1565 = vpop.f32.mrb[0].mxu0
        %v1566 = vpop.f32.mrb[0].mxu0
        %v1567 = vadd.f32 %v513, %v1566
        %v1568 = vpop.f32.mrb[0].mxu0
        %1569 = vmatprep.mubr.bf16.mxu0 %v1504
        %1570 = vmatmul.mubr.bf16.gmra.mrb[0].mxu0 %v1503
        %v1571 = vpop.f32.mrb[0].mxu0
        %v1572 = vadd.f32 %v513, %v1571
        %v1573 = vpop.f32.mrb[0].mxu0
        %v1574 = vpop.f32.mrb[0].mxu0
        %v1575 = vadd.f32 %v513, %v1574
        %v1576 = vpop.f32.mrb[0].mxu0
        %1577 = vmatprep.mubr.bf16.mxu0 %v1506
        %1578 = vmatmul.mubr.bf16.gmra.mrb[0].mxu0 %v1505
        %v1579 = vpop.f32.mrb[0].mxu0
        %v1580 = vadd.f32 %v513, %v1579
        %v1581 = vpop.f32.mrb[0].mxu0
        %v1582 = vpop.f32.mrb[0].mxu0
        %v1583 = vadd.f32 %v513, %v1582
        %v1584 = vpop.f32.mrb[0].mxu0
        %1585 = vmatprep.mubr.bf16.mxu0 %v1508
        %1586 = vmatmul.mubr.bf16.gmra.mrb[0].mxu0 %v1507
        %v1587 = vpop.f32.mrb[0].mxu0
        %v1588 = vadd.f32 %v513, %v1587
        %v1589 = vpop.f32.mrb[0].mxu0
        %v1590 = vpop.f32.mrb[0].mxu0
        %v1591 = vadd.f32 %v513, %v1590
        %v1592 = vpop.f32.mrb[0].mxu0
        %1593 = vmatprep.mubr.bf16.mxu0 %v1510
        %1594 = vmatmul.mubr.bf16.gmra.mrb[0].mxu0 %v1509
        %v1595 = vpop.f32.mrb[0].mxu0
        %v1596 = vadd.f32 %v513, %v1595
        %v1597 = vpop.f32.mrb[0].mxu0
        %v1598 = vpop.f32.mrb[0].mxu0
        %v1599 = vadd.f32 %v513, %v1598
        %v1600 = vpop.f32.mrb[0].mxu0
        %1601 = vmatprep.mubr.bf16.mxu0 %v1512
        %1602 = vmatmul.mubr.bf16.gmra.mrb[0].mxu0 %v1511
        %v1603 = vpop.f32.mrb[0].mxu0
        %v1604 = vadd.f32 %v513, %v1603
        %v1605 = vpop.f32.mrb[0].mxu0
        %v1606 = vpop.f32.mrb[0].mxu0
        %v1607 = vadd.f32 %v513, %v1606
        %v1608 = vpop.f32.mrb[0].mxu0
        %1609 = vdwg.mxu0
        %v1610 = vxor.u32 %v1548, 2147483648
        %v1611 = vxor.u32 %v1551, 2147483648
        %v1612 = vxor.u32 %v1556, 2147483648
        %v1613 = vxor.u32 %v1559, 2147483648
        %v1614 = vxor.u32 %v1564, 2147483648
        %v1615 = vxor.u32 %v1567, 2147483648
        %v1616 = vxor.u32 %v1572, 2147483648
        %v1617 = vxor.u32 %v1575, 2147483648
        %v1618 = vxor.u32 %v1580, 2147483648
        %v1619 = vxor.u32 %v1583, 2147483648
        %v1620 = vxor.u32 %v1588, 2147483648
        %v1621 = vxor.u32 %v1591, 2147483648
        %v1622 = vxor.u32 %v1596, 2147483648
        %v1623 = vxor.u32 %v1599, 2147483648
        %v1624 = vxor.u32 %v1604, 2147483648
        %v1625 = vxor.u32 %v1607, 2147483648
        %v1626 = vmul.f32 %v1610, 1.442695
        %v1627 = vpow.pop %v1626
        %v1628 = vmul.f32 %v1611, 1.442695
        %v1629 = vpow.pop %v1628
        %v1630 = vmul.f32 %v1612, 1.442695
        %v1631 = vpow.pop %v1630
        %v1632 = vmul.f32 %v1613, 1.442695
        %v1633 = vpow.pop %v1632
        %v1634 = vmul.f32 %v1614, 1.442695
        %v1635 = vpow.pop %v1634
        %v1636 = vmul.f32 %v1615, 1.442695
        %v1637 = vpow.pop %v1636
        %v1638 = vmul.f32 %v1616, 1.442695
        %v1639 = vpow.pop %v1638
        %v1640 = vmul.f32 %v1617, 1.442695
        %v1641 = vpow.pop %v1640
        %v1642 = vmul.f32 %v1618, 1.442695
        %v1643 = vpow.pop %v1642
        %v1644 = vmul.f32 %v1619, 1.442695
        %v1645 = vpow.pop %v1644
        %v1646 = vmul.f32 %v1620, 1.442695
        %v1647 = vpow.pop %v1646
        %v1648 = vmul.f32 %v1621, 1.442695
        %v1649 = vpow.pop %v1648
        %v1650 = vmul.f32 %v1622, 1.442695
        %v1651 = vpow.pop %v1650
        %v1652 = vmul.f32 %v1623, 1.442695
        %v1653 = vpow.pop %v1652
        %v1654 = vmul.f32 %v1624, 1.442695
        %v1655 = vpow.pop %v1654
        %v1656 = vmul.f32 %v1625, 1.442695
        %v1657 = vpow.pop %v1656
        %v1658 = vadd.f32 %v1627, 1.0
        %v1659 = vadd.f32 %v1629, 1.0
        %v1660 = vadd.f32 %v1631, 1.0
        %v1661 = vadd.f32 %v1633, 1.0
        %v1662 = vadd.f32 %v1635, 1.0
        %v1663 = vadd.f32 %v1637, 1.0
        %v1664 = vadd.f32 %v1639, 1.0
        %v1665 = vadd.f32 %v1641, 1.0
        %v1666 = vadd.f32 %v1643, 1.0
        %v1667 = vadd.f32 %v1645, 1.0
        %v1668 = vadd.f32 %v1647, 1.0
        %v1669 = vadd.f32 %v1649, 1.0
        %v1670 = vadd.f32 %v1651, 1.0
        %v1671 = vadd.f32 %v1653, 1.0
        %v1672 = vadd.f32 %v1655, 1.0
        %v1673 = vadd.f32 %v1657, 1.0
        %v1674 = vrcp.pop %v1658
        %v1675 = vmul.f32 1.0, %v1674
        %v1676 = vrcp.pop %v1659
        %v1677 = vmul.f32 1.0, %v1676
        %v1678 = vrcp.pop %v1660
        %v1679 = vmul.f32 1.0, %v1678
        %v1680 = vrcp.pop %v1661
        %v1681 = vmul.f32 1.0, %v1680
        %v1682 = vrcp.pop %v1662
        %v1683 = vmul.f32 1.0, %v1682
        %v1684 = vrcp.pop %v1663
        %v1685 = vmul.f32 1.0, %v1684
        %v1686 = vrcp.pop %v1664
        %v1687 = vmul.f32 1.0, %v1686
        %v1688 = vrcp.pop %v1665
        %v1689 = vmul.f32 1.0, %v1688
        %v1690 = vrcp.pop %v1666
        %v1691 = vmul.f32 1.0, %v1690
        %v1692 = vrcp.pop %v1667
        %v1693 = vmul.f32 1.0, %v1692
        %v1694 = vrcp.pop %v1668
        %v1695 = vmul.f32 1.0, %v1694
        %v1696 = vrcp.pop %v1669
        %v1697 = vmul.f32 1.0, %v1696
        %v1698 = vrcp.pop %v1670
        %v1699 = vmul.f32 1.0, %v1698
        %v1700 = vrcp.pop %v1671
        %v1701 = vmul.f32 1.0, %v1700
        %v1702 = vrcp.pop %v1672
        %v1703 = vmul.f32 1.0, %v1702
        %v1704 = vrcp.pop %v1673
        %v1705 = vmul.f32 1.0, %v1704
        %s1706 = scalar_lea.vmem %s405, 128 [#allocation8]
        %v1707 = vld [vmem:[%s1706] sm:$0xff]
        %v1708 = vld [vmem:[%s1706 + $0x8] sm:$0xff]
        %v1709 = vld [vmem:[%s1706 + $0x10] sm:$0xff]
        %v1710 = vld [vmem:[%s1706 + $0x18] sm:$0xff]
        %v1711 = vld [vmem:[%s1706 + $0x20] sm:$0xff]
        %v1712 = vld [vmem:[%s1706 + $0x28] sm:$0xff]
        %v1713 = vld [vmem:[%s1706 + $0x30] sm:$0xff]
        %v1714 = vld [vmem:[%s1706 + $0x38] sm:$0xff]
        %v1715 = vld [vmem:[%s1706 + $0x40] sm:$0xff]
        %v1716 = vld [vmem:[%s1706 + $0x48] sm:$0xff]
        %v1717 = vld [vmem:[%s1706 + $0x50] sm:$0xff]
        %v1718 = vld [vmem:[%s1706 + $0x58] sm:$0xff]
        %v1719 = vld [vmem:[%s1706 + $0x60] sm:$0xff]
        %v1720 = vld [vmem:[%s1706 + $0x68] sm:$0xff]
        %v1721 = vld [vmem:[%s1706 + $0x70] sm:$0xff]
        %v1722 = vld [vmem:[%s1706 + $0x78] sm:$0xff]
        %vm1723 = vcmp.lt.f32.partialorder %v1707, %v1675
        %vm1724 = vcmp.lt.f32.partialorder %v1708, %v1677
        %vm1725 = vcmp.lt.f32.partialorder %v1709, %v1679
        %vm1726 = vcmp.lt.f32.partialorder %v1710, %v1681
        %vm1727 = vcmp.lt.f32.partialorder %v1711, %v1683
        %vm1728 = vcmp.lt.f32.partialorder %v1712, %v1685
        %vm1729 = vcmp.lt.f32.partialorder %v1713, %v1687
        %vm1730 = vcmp.lt.f32.partialorder %v1714, %v1689
        %vm1731 = vcmp.lt.f32.partialorder %v1715, %v1691
        %vm1732 = vcmp.lt.f32.partialorder %v1716, %v1693
        %vm1733 = vcmp.lt.f32.partialorder %v1717, %v1695
        %vm1734 = vcmp.lt.f32.partialorder %v1718, %v1697
        %vm1735 = vcmp.lt.f32.partialorder %v1719, %v1699
        %vm1736 = vcmp.lt.f32.partialorder %v1720, %v1701
        %vm1737 = vcmp.lt.f32.partialorder %v1721, %v1703
        %vm1738 = vcmp.lt.f32.partialorder %v1722, %v1705
        %v1739 = vsel %vm1723, 1, 0
        %v1740 = vsel %vm1724, 1, 0
        %v1741 = vsel %vm1725, 1, 0
        %v1742 = vsel %vm1726, 1, 0
        %v1743 = vsel %vm1727, 1, 0
        %v1744 = vsel %vm1728, 1, 0
        %v1745 = vsel %vm1729, 1, 0
        %v1746 = vsel %vm1730, 1, 0
        %v1747 = vsel %vm1731, 1, 0
        %v1748 = vsel %vm1732, 1, 0
        %v1749 = vsel %vm1733, 1, 0
        %v1750 = vsel %vm1734, 1, 0
        %v1751 = vsel %vm1735, 1, 0
        %v1752 = vsel %vm1736, 1, 0
        %v1753 = vsel %vm1737, 1, 0
        %v1754 = vsel %vm1738, 1, 0
        %v1755 = vcvt.s32.f32 %v1739
        %v1756 = vcvt.s32.f32 %v1740
        %v1757 = vcvt.s32.f32 %v1741
        %v1758 = vcvt.s32.f32 %v1742
        %v1759 = vcvt.s32.f32 %v1743
        %v1760 = vcvt.s32.f32 %v1744
        %v1761 = vcvt.s32.f32 %v1745
        %v1762 = vcvt.s32.f32 %v1746
        %v1763 = vcvt.s32.f32 %v1747
        %v1764 = vcvt.s32.f32 %v1748
        %v1765 = vcvt.s32.f32 %v1749
        %v1766 = vcvt.s32.f32 %v1750
        %v1767 = vcvt.s32.f32 %v1751
        %v1768 = vcvt.s32.f32 %v1752
        %v1769 = vcvt.s32.f32 %v1753
        %v1770 = vcvt.s32.f32 %v1754
        %v1771 = vpack.c.bf16 %v1756, %v1755
        %v1772 = vpack.c.bf16 %v1758, %v1757
        %v1773 = vpack.c.bf16 %v1760, %v1759
        %v1774 = vpack.c.bf16 %v1762, %v1761
        %v1775 = vpack.c.bf16 %v1764, %v1763
        %v1776 = vpack.c.bf16 %v1766, %v1765
        %v1777 = vpack.c.bf16 %v1768, %v1767
        %v1778 = vpack.c.bf16 %v1770, %v1769
        %1779 = vmatprep.subr.bf16.mxu0 %v1033
        %1780 = vmatpush1.bf16.msra.mxu0 %v1032
        %1781 = vmatprep.subr.bf16.mxu0 %v1035
        %1782 = vmatpush1.bf16.msra.mxu0 %v1034
        %1783 = vmatprep.subr.bf16.mxu0 %v1037
        %1784 = vmatpush1.bf16.msra.mxu0 %v1036
        %1785 = vmatprep.subr.bf16.mxu0 %v1039
        %1786 = vmatpush1.bf16.msra.mxu0 %v1038
        %1787 = vmatprep.subr.bf16.mxu0 %v1041
        %1788 = vmatpush1.bf16.msra.mxu0 %v1040
        %1789 = vmatprep.subr.bf16.mxu0 %v1043
        %1790 = vmatpush1.bf16.msra.mxu0 %v1042
        %1791 = vmatprep.subr.bf16.mxu0 %v1045
        %1792 = vmatpush1.bf16.msra.mxu0 %v1044
        %1793 = vmatprep.subr.bf16.mxu0 %v1047
        %1794 = vmatpush1.bf16.msra.mxu0 %v1046
        %1795 = vmatprep.subr.bf16.mxu0 0
        %1796 = vmatpush1.bf16.msra.mxu0 0
        %1797 = vmatprep.subr.bf16.mxu0 0
        %1798 = vmatpush1.bf16.msra.mxu0 0
        %1799 = vmatprep.subr.bf16.mxu0 0
        %1800 = vmatpush1.bf16.msra.mxu0 0
        %1801 = vmatprep.subr.bf16.mxu0 0
        %1802 = vmatpush1.bf16.msra.mxu0 0
        %1803 = vmatprep.subr.bf16.mxu0 0
        %1804 = vmatpush1.bf16.msra.mxu0 0
        %1805 = vmatprep.subr.bf16.mxu0 0
        %1806 = vmatpush1.bf16.msra.mxu0 0
        %1807 = vmatprep.subr.bf16.mxu0 0
        %1808 = vmatpush1.bf16.msra.mxu0 0
        %1809 = vmatprep.subr.bf16.mxu0 0
        %1810 = vmatpush1.bf16.msra.mxu0 0
        %1811 = vmatprep.mubr.bf16.mxu0 0
        %1812 = vmatmul.mubr.bf16.gmra.mrb[0].mxu0 %v1771
        %v1813 = vpop.f32.mrb[0].mxu0
        %v1814 = vadd.f32 %v520, %v1813
        %v1815 = vpop.f32.mrb[0].mxu0
        %v1816 = vadd.f32 %v524, %v1815
        %v1817 = vpop.f32.mrb[0].mxu0
        %v1818 = vadd.f32 %v520, %v1817
        %v1819 = vpop.f32.mrb[0].mxu0
        %v1820 = vadd.f32 %v524, %v1819
        %1821 = vmatprep.mubr.bf16.mxu0 0
        %1822 = vmatmul.mubr.bf16.gmra.mrb[0].mxu0 %v1772
        %v1823 = vpop.f32.mrb[0].mxu0
        %v1824 = vadd.f32 %v520, %v1823
        %v1825 = vpop.f32.mrb[0].mxu0
        %v1826 = vadd.f32 %v524, %v1825
        %v1827 = vpop.f32.mrb[0].mxu0
        %v1828 = vadd.f32 %v520, %v1827
        %v1829 = vpop.f32.mrb[0].mxu0
        %v1830 = vadd.f32 %v524, %v1829
        %1831 = vmatprep.mubr.bf16.mxu0 0
        %1832 = vmatmul.mubr.bf16.gmra.mrb[0].mxu0 %v1773
        %v1833 = vpop.f32.mrb[0].mxu0
        %v1834 = vadd.f32 %v520, %v1833
        %v1835 = vpop.f32.mrb[0].mxu0
        %v1836 = vadd.f32 %v524, %v1835
        %v1837 = vpop.f32.mrb[0].mxu0
        %v1838 = vadd.f32 %v520, %v1837
        %v1839 = vpop.f32.mrb[0].mxu0
        %v1840 = vadd.f32 %v524, %v1839
        %1841 = vmatprep.mubr.bf16.mxu0 0
        %1842 = vmatmul.mubr.bf16.gmra.mrb[0].mxu0 %v1774
        %v1843 = vpop.f32.mrb[0].mxu0
        %v1844 = vadd.f32 %v520, %v1843
        %v1845 = vpop.f32.mrb[0].mxu0
        %v1846 = vadd.f32 %v524, %v1845
        %v1847 = vpop.f32.mrb[0].mxu0
        %v1848 = vadd.f32 %v520, %v1847
        %v1849 = vpop.f32.mrb[0].mxu0
        %v1850 = vadd.f32 %v524, %v1849
        %1851 = vmatprep.mubr.bf16.mxu0 0
        %1852 = vmatmul.mubr.bf16.gmra.mrb[0].mxu0 %v1775
        %v1853 = vpop.f32.mrb[0].mxu0
        %v1854 = vadd.f32 %v520, %v1853
        %v1855 = vpop.f32.mrb[0].mxu0
        %v1856 = vadd.f32 %v524, %v1855
        %v1857 = vpop.f32.mrb[0].mxu0
        %v1858 = vadd.f32 %v520, %v1857
        %v1859 = vpop.f32.mrb[0].mxu0
        %v1860 = vadd.f32 %v524, %v1859
        %1861 = vmatprep.mubr.bf16.mxu0 0
        %1862 = vmatmul.mubr.bf16.gmra.mrb[0].mxu0 %v1776
        %v1863 = vpop.f32.mrb[0].mxu0
        %v1864 = vadd.f32 %v520, %v1863
        %v1865 = vpop.f32.mrb[0].mxu0
        %v1866 = vadd.f32 %v524, %v1865
        %v1867 = vpop.f32.mrb[0].mxu0
        %v1868 = vadd.f32 %v520, %v1867
        %v1869 = vpop.f32.mrb[0].mxu0
        %v1870 = vadd.f32 %v524, %v1869
        %1871 = vmatprep.mubr.bf16.mxu0 0
        %1872 = vmatmul.mubr.bf16.gmra.mrb[0].mxu0 %v1777
        %v1873 = vpop.f32.mrb[0].mxu0
        %v1874 = vadd.f32 %v520, %v1873
        %v1875 = vpop.f32.mrb[0].mxu0
        %v1876 = vadd.f32 %v524, %v1875
        %v1877 = vpop.f32.mrb[0].mxu0
        %v1878 = vadd.f32 %v520, %v1877
        %v1879 = vpop.f32.mrb[0].mxu0
        %v1880 = vadd.f32 %v524, %v1879
        %1881 = vmatprep.mubr.bf16.mxu0 0
        %1882 = vmatmul.mubr.bf16.gmra.mrb[0].mxu0 %v1778
        %v1883 = vpop.f32.mrb[0].mxu0
        %v1884 = vadd.f32 %v520, %v1883
        %v1885 = vpop.f32.mrb[0].mxu0
        %v1886 = vadd.f32 %v524, %v1885
        %v1887 = vpop.f32.mrb[0].mxu0
        %v1888 = vadd.f32 %v520, %v1887
        %v1889 = vpop.f32.mrb[0].mxu0
        %v1890 = vadd.f32 %v524, %v1889
        %1891 = vdwg.mxu0
        %v1892 = vxor.u32 %v1814, 2147483648
        %v1893 = vxor.u32 %v1816, 2147483648
        %v1894 = vxor.u32 %v1818, 2147483648
        %v1895 = vxor.u32 %v1820, 2147483648
        %v1896 = vxor.u32 %v1824, 2147483648
        %v1897 = vxor.u32 %v1826, 2147483648
        %v1898 = vxor.u32 %v1828, 2147483648
        %v1899 = vxor.u32 %v1830, 2147483648
        %v1900 = vxor.u32 %v1834, 2147483648
        %v1901 = vxor.u32 %v1836, 2147483648
        %v1902 = vxor.u32 %v1838, 2147483648
        %v1903 = vxor.u32 %v1840, 2147483648
        %v1904 = vxor.u32 %v1844, 2147483648
        %v1905 = vxor.u32 %v1846, 2147483648
        %v1906 = vxor.u32 %v1848, 2147483648
        %v1907 = vxor.u32 %v1850, 2147483648
        %v1908 = vxor.u32 %v1854, 2147483648
        %v1909 = vxor.u32 %v1856, 2147483648
        %v1910 = vxor.u32 %v1858, 2147483648
        %v1911 = vxor.u32 %v1860, 2147483648
        %v1912 = vxor.u32 %v1864, 2147483648
        %v1913 = vxor.u32 %v1866, 2147483648
        %v1914 = vxor.u32 %v1868, 2147483648
        %v1915 = vxor.u32 %v1870, 2147483648
        %v1916 = vxor.u32 %v1874, 2147483648
        %v1917 = vxor.u32 %v1876, 2147483648
        %v1918 = vxor.u32 %v1878, 2147483648
        %v1919 = vxor.u32 %v1880, 2147483648
        %v1920 = vxor.u32 %v1884, 2147483648
        %v1921 = vxor.u32 %v1886, 2147483648
        %v1922 = vxor.u32 %v1888, 2147483648
        %v1923 = vxor.u32 %v1890, 2147483648
        %v1924 = vmul.f32 %v1892, 1.442695
        %v1925 = vpow.pop %v1924
        %v1926 = vmul.f32 %v1893, 1.442695
        %v1927 = vpow.pop %v1926
        %v1928 = vmul.f32 %v1894, 1.442695
        %v1929 = vpow.pop %v1928
        %v1930 = vmul.f32 %v1895, 1.442695
        %v1931 = vpow.pop %v1930
        %v1932 = vmul.f32 %v1896, 1.442695
        %v1933 = vpow.pop %v1932
        %v1934 = vmul.f32 %v1897, 1.442695
        %v1935 = vpow.pop %v1934
        %v1936 = vmul.f32 %v1898, 1.442695
        %v1937 = vpow.pop %v1936
        %v1938 = vmul.f32 %v1899, 1.442695
        %v1939 = vpow.pop %v1938
        %v1940 = vmul.f32 %v1900, 1.442695
        %v1941 = vpow.pop %v1940
        %v1942 = vmul.f32 %v1901, 1.442695
        %v1943 = vpow.pop %v1942
        %v1944 = vmul.f32 %v1902, 1.442695
        %v1945 = vpow.pop %v1944
        %v1946 = vmul.f32 %v1903, 1.442695
        %v1947 = vpow.pop %v1946
        %v1948 = vmul.f32 %v1904, 1.442695
        %v1949 = vpow.pop %v1948
        %v1950 = vmul.f32 %v1905, 1.442695
        %v1951 = vpow.pop %v1950
        %v1952 = vmul.f32 %v1906, 1.442695
        %v1953 = vpow.pop %v1952
        %v1954 = vmul.f32 %v1907, 1.442695
        %v1955 = vpow.pop %v1954
        %v1956 = vmul.f32 %v1908, 1.442695
        %v1957 = vpow.pop %v1956
        %v1958 = vmul.f32 %v1909, 1.442695
        %v1959 = vpow.pop %v1958
        %v1960 = vmul.f32 %v1910, 1.442695
        %v1961 = vpow.pop %v1960
        %v1962 = vmul.f32 %v1911, 1.442695
        %v1963 = vpow.pop %v1962
        %v1964 = vmul.f32 %v1912, 1.442695
        %v1965 = vpow.pop %v1964
        %v1966 = vmul.f32 %v1913, 1.442695
        %v1967 = vpow.pop %v1966
        %v1968 = vmul.f32 %v1914, 1.442695
        %v1969 = vpow.pop %v1968
        %v1970 = vmul.f32 %v1915, 1.442695
        %v1971 = vpow.pop %v1970
        %v1972 = vmul.f32 %v1916, 1.442695
        %v1973 = vpow.pop %v1972
        %v1974 = vmul.f32 %v1917, 1.442695
        %v1975 = vpow.pop %v1974
        %v1976 = vmul.f32 %v1918, 1.442695
        %v1977 = vpow.pop %v1976
        %v1978 = vmul.f32 %v1919, 1.442695
        %v1979 = vpow.pop %v1978
        %v1980 = vmul.f32 %v1920, 1.442695
        %v1981 = vpow.pop %v1980
        %v1982 = vmul.f32 %v1921, 1.442695
        %v1983 = vpow.pop %v1982
        %v1984 = vmul.f32 %v1922, 1.442695
        %v1985 = vpow.pop %v1984
        %v1986 = vmul.f32 %v1923, 1.442695
        %v1987 = vpow.pop %v1986
        %v1988 = vadd.f32 %v1925, 1.0
        %v1989 = vadd.f32 %v1927, 1.0
        %v1990 = vadd.f32 %v1929, 1.0
        %v1991 = vadd.f32 %v1931, 1.0
        %v1992 = vadd.f32 %v1933, 1.0
        %v1993 = vadd.f32 %v1935, 1.0
        %v1994 = vadd.f32 %v1937, 1.0
        %v1995 = vadd.f32 %v1939, 1.0
        %v1996 = vadd.f32 %v1941, 1.0
        %v1997 = vadd.f32 %v1943, 1.0
        %v1998 = vadd.f32 %v1945, 1.0
        %v1999 = vadd.f32 %v1947, 1.0
        %v2000 = vadd.f32 %v1949, 1.0
        %v2001 = vadd.f32 %v1951, 1.0
        %v2002 = vadd.f32 %v1953, 1.0
        %v2003 = vadd.f32 %v1955, 1.0
        %v2004 = vadd.f32 %v1957, 1.0
        %v2005 = vadd.f32 %v1959, 1.0
        %v2006 = vadd.f32 %v1961, 1.0
        %v2007 = vadd.f32 %v1963, 1.0
        %v2008 = vadd.f32 %v1965, 1.0
        %v2009 = vadd.f32 %v1967, 1.0
        %v2010 = vadd.f32 %v1969, 1.0
        %v2011 = vadd.f32 %v1971, 1.0
        %v2012 = vadd.f32 %v1973, 1.0
        %v2013 = vadd.f32 %v1975, 1.0
        %v2014 = vadd.f32 %v1977, 1.0
        %v2015 = vadd.f32 %v1979, 1.0
        %v2016 = vadd.f32 %v1981, 1.0
        %v2017 = vadd.f32 %v1983, 1.0
        %v2018 = vadd.f32 %v1985, 1.0
        %v2019 = vadd.f32 %v1987, 1.0
        %v2020 = vrcp.pop %v1988
        %v2021 = vmul.f32 1.0, %v2020
        %v2022 = vrcp.pop %v1989
        %v2023 = vmul.f32 1.0, %v2022
        %v2024 = vrcp.pop %v1990
        %v2025 = vmul.f32 1.0, %v2024
        %v2026 = vrcp.pop %v1991
        %v2027 = vmul.f32 1.0, %v2026
        %v2028 = vrcp.pop %v1992
        %v2029 = vmul.f32 1.0, %v2028
        %v2030 = vrcp.pop %v1993
        %v2031 = vmul.f32 1.0, %v2030
        %v2032 = vrcp.pop %v1994
        %v2033 = vmul.f32 1.0, %v2032
        %v2034 = vrcp.pop %v1995
        %v2035 = vmul.f32 1.0, %v2034
        %v2036 = vrcp.pop %v1996
        %v2037 = vmul.f32 1.0, %v2036
        %v2038 = vrcp.pop %v1997
        %v2039 = vmul.f32 1.0, %v2038
        %v2040 = vrcp.pop %v1998
        %v2041 = vmul.f32 1.0, %v2040
        %v2042 = vrcp.pop %v1999
        %v2043 = vmul.f32 1.0, %v2042
        %v2044 = vrcp.pop %v2000
        %v2045 = vmul.f32 1.0, %v2044
        %v2046 = vrcp.pop %v2001
        %v2047 = vmul.f32 1.0, %v2046
        %v2048 = vrcp.pop %v2002
        %v2049 = vmul.f32 1.0, %v2048
        %v2050 = vrcp.pop %v2003
        %v2051 = vmul.f32 1.0, %v2050
        %v2052 = vrcp.pop %v2004
        %v2053 = vmul.f32 1.0, %v2052
        %v2054 = vrcp.pop %v2005
        %v2055 = vmul.f32 1.0, %v2054
        %v2056 = vrcp.pop %v2006
        %v2057 = vmul.f32 1.0, %v2056
        %v2058 = vrcp.pop %v2007
        %v2059 = vmul.f32 1.0, %v2058
        %v2060 = vrcp.pop %v2008
        %v2061 = vmul.f32 1.0, %v2060
        %v2062 = vrcp.pop %v2009
        %v2063 = vmul.f32 1.0, %v2062
        %v2064 = vrcp.pop %v2010
        %v2065 = vmul.f32 1.0, %v2064
        %v2066 = vrcp.pop %v2011
        %v2067 = vmul.f32 1.0, %v2066
        %v2068 = vrcp.pop %v2012
        %v2069 = vmul.f32 1.0, %v2068
        %v2070 = vrcp.pop %v2013
        %v2071 = vmul.f32 1.0, %v2070
        %v2072 = vrcp.pop %v2014
        %v2073 = vmul.f32 1.0, %v2072
        %v2074 = vrcp.pop %v2015
        %v2075 = vmul.f32 1.0, %v2074
        %v2076 = vrcp.pop %v2016
        %v2077 = vmul.f32 1.0, %v2076
        %v2078 = vrcp.pop %v2017
        %v2079 = vmul.f32 1.0, %v2078
        %v2080 = vrcp.pop %v2018
        %v2081 = vmul.f32 1.0, %v2080
        %v2082 = vrcp.pop %v2019
        %v2083 = vmul.f32 1.0, %v2082
        %s2084 = scalar_lea.vmem %s414, 256 [#allocation10]
        %v2085 = vld [vmem:[%s2084] sm:$0xff]
        %v2086 = vld [vmem:[%s2084 + $0x8] sm:$0xff]
        %v2087 = vld [vmem:[%s2084 + $0x10] sm:$0xff]
        %v2088 = vld [vmem:[%s2084 + $0x18] sm:$0xff]
        %v2089 = vld [vmem:[%s2084 + $0x20] sm:$0xff]
        %v2090 = vld [vmem:[%s2084 + $0x28] sm:$0xff]
        %v2091 = vld [vmem:[%s2084 + $0x30] sm:$0xff]
        %v2092 = vld [vmem:[%s2084 + $0x38] sm:$0xff]
        %v2093 = vld [vmem:[%s2084 + $0x40] sm:$0xff]
        %v2094 = vld [vmem:[%s2084 + $0x48] sm:$0xff]
        %v2095 = vld [vmem:[%s2084 + $0x50] sm:$0xff]
        %v2096 = vld [vmem:[%s2084 + $0x58] sm:$0xff]
        %v2097 = vld [vmem:[%s2084 + $0x60] sm:$0xff]
        %v2098 = vld [vmem:[%s2084 + $0x68] sm:$0xff]
        %v2099 = vld [vmem:[%s2084 + $0x70] sm:$0xff]
        %v2100 = vld [vmem:[%s2084 + $0x78] sm:$0xff]
        %v2101 = vld [vmem:[%s2084 + $0x80] sm:$0xff]
        %v2102 = vld [vmem:[%s2084 + $0x88] sm:$0xff]
        %v2103 = vld [vmem:[%s2084 + $0x90] sm:$0xff]
        %v2104 = vld [vmem:[%s2084 + $0x98] sm:$0xff]
        %v2105 = vld [vmem:[%s2084 + $0xa0] sm:$0xff]
        %v2106 = vld [vmem:[%s2084 + $0xa8] sm:$0xff]
        %v2107 = vld [vmem:[%s2084 + $0xb0] sm:$0xff]
        %v2108 = vld [vmem:[%s2084 + $0xb8] sm:$0xff]
        %v2109 = vld [vmem:[%s2084 + $0xc0] sm:$0xff]
        %v2110 = vld [vmem:[%s2084 + $0xc8] sm:$0xff]
        %v2111 = vld [vmem:[%s2084 + $0xd0] sm:$0xff]
        %v2112 = vld [vmem:[%s2084 + $0xd8] sm:$0xff]
        %v2113 = vld [vmem:[%s2084 + $0xe0] sm:$0xff]
        %v2114 = vld [vmem:[%s2084 + $0xe8] sm:$0xff]
        %v2115 = vld [vmem:[%s2084 + $0xf0] sm:$0xff]
        %v2116 = vld [vmem:[%s2084 + $0xf8] sm:$0xff]
        %vm2117 = vcmp.lt.f32.partialorder %v2085, %v2021
        %vm2118 = vcmp.lt.f32.partialorder %v2086, %v2023
        %vm2119 = vcmp.lt.f32.partialorder %v2087, %v2025
        %vm2120 = vcmp.lt.f32.partialorder %v2088, %v2027
        %vm2121 = vcmp.lt.f32.partialorder %v2089, %v2029
        %vm2122 = vcmp.lt.f32.partialorder %v2090, %v2031
        %vm2123 = vcmp.lt.f32.partialorder %v2091, %v2033
        %vm2124 = vcmp.lt.f32.partialorder %v2092, %v2035
        %vm2125 = vcmp.lt.f32.partialorder %v2093, %v2037
        %vm2126 = vcmp.lt.f32.partialorder %v2094, %v2039
        %vm2127 = vcmp.lt.f32.partialorder %v2095, %v2041
        %vm2128 = vcmp.lt.f32.partialorder %v2096, %v2043
        %vm2129 = vcmp.lt.f32.partialorder %v2097, %v2045
        %vm2130 = vcmp.lt.f32.partialorder %v2098, %v2047
        %vm2131 = vcmp.lt.f32.partialorder %v2099, %v2049
        %vm2132 = vcmp.lt.f32.partialorder %v2100, %v2051
        %vm2133 = vcmp.lt.f32.partialorder %v2101, %v2053
        %vm2134 = vcmp.lt.f32.partialorder %v2102, %v2055
        %vm2135 = vcmp.lt.f32.partialorder %v2103, %v2057
        %vm2136 = vcmp.lt.f32.partialorder %v2104, %v2059
        %vm2137 = vcmp.lt.f32.partialorder %v2105, %v2061
        %vm2138 = vcmp.lt.f32.partialorder %v2106, %v2063
        %vm2139 = vcmp.lt.f32.partialorder %v2107, %v2065
        %vm2140 = vcmp.lt.f32.partialorder %v2108, %v2067
        %vm2141 = vcmp.lt.f32.partialorder %v2109, %v2069
        %vm2142 = vcmp.lt.f32.partialorder %v2110, %v2071
        %vm2143 = vcmp.lt.f32.partialorder %v2111, %v2073
        %vm2144 = vcmp.lt.f32.partialorder %v2112, %v2075
        %vm2145 = vcmp.lt.f32.partialorder %v2113, %v2077
        %vm2146 = vcmp.lt.f32.partialorder %v2114, %v2079
        %vm2147 = vcmp.lt.f32.partialorder %v2115, %v2081
        %vm2148 = vcmp.lt.f32.partialorder %v2116, %v2083
        %v2149 = vsel %vm2117, 1, 0
        %v2150 = vsel %vm2118, 1, 0
        %v2151 = vsel %vm2119, 1, 0
        %v2152 = vsel %vm2120, 1, 0
        %v2153 = vsel %vm2121, 1, 0
        %v2154 = vsel %vm2122, 1, 0
        %v2155 = vsel %vm2123, 1, 0
        %v2156 = vsel %vm2124, 1, 0
        %v2157 = vsel %vm2125, 1, 0
        %v2158 = vsel %vm2126, 1, 0
        %v2159 = vsel %vm2127, 1, 0
        %v2160 = vsel %vm2128, 1, 0
        %v2161 = vsel %vm2129, 1, 0
        %v2162 = vsel %vm2130, 1, 0
        %v2163 = vsel %vm2131, 1, 0
        %v2164 = vsel %vm2132, 1, 0
        %v2165 = vsel %vm2133, 1, 0
        %v2166 = vsel %vm2134, 1, 0
        %v2167 = vsel %vm2135, 1, 0
        %v2168 = vsel %vm2136, 1, 0
        %v2169 = vsel %vm2137, 1, 0
        %v2170 = vsel %vm2138, 1, 0
        %v2171 = vsel %vm2139, 1, 0
        %v2172 = vsel %vm2140, 1, 0
        %v2173 = vsel %vm2141, 1, 0
        %v2174 = vsel %vm2142, 1, 0
        %v2175 = vsel %vm2143, 1, 0
        %v2176 = vsel %vm2144, 1, 0
        %v2177 = vsel %vm2145, 1, 0
        %v2178 = vsel %vm2146, 1, 0
        %v2179 = vsel %vm2147, 1, 0
        %v2180 = vsel %vm2148, 1, 0
        %v2181 = vcvt.s32.f32 %v2149
        %v2182 = vcvt.s32.f32 %v2150
        %v2183 = vcvt.s32.f32 %v2151
        %v2184 = vcvt.s32.f32 %v2152
        %v2185 = vcvt.s32.f32 %v2153
        %v2186 = vcvt.s32.f32 %v2154
        %v2187 = vcvt.s32.f32 %v2155
        %v2188 = vcvt.s32.f32 %v2156
        %v2189 = vcvt.s32.f32 %v2157
        %v2190 = vcvt.s32.f32 %v2158
        %v2191 = vcvt.s32.f32 %v2159
        %v2192 = vcvt.s32.f32 %v2160
        %v2193 = vcvt.s32.f32 %v2161
        %v2194 = vcvt.s32.f32 %v2162
        %v2195 = vcvt.s32.f32 %v2163
        %v2196 = vcvt.s32.f32 %v2164
        %v2197 = vcvt.s32.f32 %v2165
        %v2198 = vcvt.s32.f32 %v2166
        %v2199 = vcvt.s32.f32 %v2167
        %v2200 = vcvt.s32.f32 %v2168
        %v2201 = vcvt.s32.f32 %v2169
        %v2202 = vcvt.s32.f32 %v2170
        %v2203 = vcvt.s32.f32 %v2171
        %v2204 = vcvt.s32.f32 %v2172
        %v2205 = vcvt.s32.f32 %v2173
        %v2206 = vcvt.s32.f32 %v2174
        %v2207 = vcvt.s32.f32 %v2175
        %v2208 = vcvt.s32.f32 %v2176
        %v2209 = vcvt.s32.f32 %v2177
        %v2210 = vcvt.s32.f32 %v2178
        %v2211 = vcvt.s32.f32 %v2179
        %v2212 = vcvt.s32.f32 %v2180
        %v2213 = vpack.c.bf16 %v2183, %v2181
        %v2214 = vpack.c.bf16 %v2184, %v2182
        %v2215 = vpack.c.bf16 %v2187, %v2185
        %v2216 = vpack.c.bf16 %v2188, %v2186
        %v2217 = vpack.c.bf16 %v2191, %v2189
        %v2218 = vpack.c.bf16 %v2192, %v2190
        %v2219 = vpack.c.bf16 %v2195, %v2193
        %v2220 = vpack.c.bf16 %v2196, %v2194
        %v2221 = vpack.c.bf16 %v2199, %v2197
        %v2222 = vpack.c.bf16 %v2200, %v2198
        %v2223 = vpack.c.bf16 %v2203, %v2201
        %v2224 = vpack.c.bf16 %v2204, %v2202
        %v2225 = vpack.c.bf16 %v2207, %v2205
        %v2226 = vpack.c.bf16 %v2208, %v2206
        %v2227 = vpack.c.bf16 %v2211, %v2209
        %v2228 = vpack.c.bf16 %v2212, %v2210
        %v2229 = vunpack.c.l.bf16 %v2213
        %v2230 = vunpack.c.l.bf16 %v2214
        %v2231 = vunpack.c.h.bf16 %v2213
        %v2232 = vunpack.c.h.bf16 %v2214
        %v2233 = vunpack.c.l.bf16 %v2215
        %v2234 = vunpack.c.l.bf16 %v2216
        %v2235 = vunpack.c.h.bf16 %v2215
        %v2236 = vunpack.c.h.bf16 %v2216
        %v2237 = vunpack.c.l.bf16 %v2217
        %v2238 = vunpack.c.l.bf16 %v2218
        %v2239 = vunpack.c.h.bf16 %v2217
        %v2240 = vunpack.c.h.bf16 %v2218
        %v2241 = vunpack.c.l.bf16 %v2219
        %v2242 = vunpack.c.l.bf16 %v2220
        %v2243 = vunpack.c.h.bf16 %v2219
        %v2244 = vunpack.c.h.bf16 %v2220
        %v2245 = vunpack.c.l.bf16 %v2221
        %v2246 = vunpack.c.l.bf16 %v2222
        %v2247 = vunpack.c.h.bf16 %v2221
        %v2248 = vunpack.c.h.bf16 %v2222
        %v2249 = vunpack.c.l.bf16 %v2223
        %v2250 = vunpack.c.l.bf16 %v2224
        %v2251 = vunpack.c.h.bf16 %v2223
        %v2252 = vunpack.c.h.bf16 %v2224
        %v2253 = vunpack.c.l.bf16 %v2225
        %v2254 = vunpack.c.l.bf16 %v2226
        %v2255 = vunpack.c.h.bf16 %v2225
        %v2256 = vunpack.c.h.bf16 %v2226
        %v2257 = vunpack.c.l.bf16 %v2227
        %v2258 = vunpack.c.l.bf16 %v2228
        %v2259 = vunpack.c.h.bf16 %v2227
        %v2260 = vunpack.c.h.bf16 %v2228
        %2261 = vst [vmem:[%s454] sm:$0xff] %v2229
        %2262 = vst [vmem:[%s454 + $0x8] sm:$0xff] %v2230
        %2263 = vst [vmem:[%s454 + $0x10] sm:$0xff] %v2231
        %2264 = vst [vmem:[%s454 + $0x18] sm:$0xff] %v2232
        %2265 = vst [vmem:[%s454 + $0x20] sm:$0xff] %v2233
        %2266 = vst [vmem:[%s454 + $0x28] sm:$0xff] %v2234
        %2267 = vst [vmem:[%s454 + $0x30] sm:$0xff] %v2235
        %2268 = vst [vmem:[%s454 + $0x38] sm:$0xff] %v2236
        %2269 = vst [vmem:[%s454 + $0x40] sm:$0xff] %v2237
        %2270 = vst [vmem:[%s454 + $0x48] sm:$0xff] %v2238
        %2271 = vst [vmem:[%s454 + $0x50] sm:$0xff] %v2239
        %2272 = vst [vmem:[%s454 + $0x58] sm:$0xff] %v2240
        %2273 = vst [vmem:[%s454 + $0x60] sm:$0xff] %v2241
        %2274 = vst [vmem:[%s454 + $0x68] sm:$0xff] %v2242
        %2275 = vst [vmem:[%s454 + $0x70] sm:$0xff] %v2243
        %2276 = vst [vmem:[%s454 + $0x78] sm:$0xff] %v2244
        %2277 = vst [vmem:[%s454 + $0x80] sm:$0xff] %v2245
        %2278 = vst [vmem:[%s454 + $0x88] sm:$0xff] %v2246
        %2279 = vst [vmem:[%s454 + $0x90] sm:$0xff] %v2247
        %2280 = vst [vmem:[%s454 + $0x98] sm:$0xff] %v2248
        %2281 = vst [vmem:[%s454 + $0xa0] sm:$0xff] %v2249
        %2282 = vst [vmem:[%s454 + $0xa8] sm:$0xff] %v2250
        %2283 = vst [vmem:[%s454 + $0xb0] sm:$0xff] %v2251
        %2284 = vst [vmem:[%s454 + $0xb8] sm:$0xff] %v2252
        %2285 = vst [vmem:[%s454 + $0xc0] sm:$0xff] %v2253
        %2286 = vst [vmem:[%s454 + $0xc8] sm:$0xff] %v2254
        %2287 = vst [vmem:[%s454 + $0xd0] sm:$0xff] %v2255
        %2288 = vst [vmem:[%s454 + $0xd8] sm:$0xff] %v2256
        %2289 = vst [vmem:[%s454 + $0xe0] sm:$0xff] %v2257
        %2290 = vst [vmem:[%s454 + $0xe8] sm:$0xff] %v2258
        %2291 = vst [vmem:[%s454 + $0xf0] sm:$0xff] %v2259
        %2292 = vst [vmem:[%s454 + $0xf8] sm:$0xff] %v2260
        %s2293 = sand.u32 %s198, 1
        %s2294 = scalar_lea.sflag [#allocation4], %s2293
        %s2295 = sand.u32 %s198, 1
        %s2296 = smul.addr %s2295, 256
        %s2297 = scalar_lea.vmem [#allocation11], %s2296
        // Predicated region
        $region69: #{tpu_custom_call.1} parent=47 // pred_check
          %p2298 = pneg %p208
        $region70: #{tpu_custom_call.1} parent=47 // pred_check_branch
          %2300 = sbr.rel (%p2298) target = $region72
        $region71: #{tpu_custom_call.1} parent=47 // pred_region
          %s2301 = smul.u32 16, %s28
          %s2303 = ssub.s32 4096, 4096
          %2304 = vsyncadd %s2294, %s2303
          %s2305 = smul.addr %s2301, 2
          %s2306 = smul.addr %s2305, 128
          %s2307 = scalar_lea.hbm %s7, %s2306
          %s2308 = sshll.u32 %s2297, 4
          %s2309 = int_to_ptr.vmem [resolvable:$true] %s2308
          %2314 = dma.vmem_to_hbm [thread:$0]  %s2309, 4096, %s2307, %s2294, 256, 256, 16
        $region72: #{tpu_custom_call.1} parent=47 // pred_fallthru
          _
      $region48: #{tpu_custom_call.1} parent=5 // pred_fallthru
        _
      %p2315 = scmp.le.s32.totalorder 2, %s23
      // Predicated region
      $region73: #{tpu_custom_call.1} parent=5 // pred_check
        %p2316 = pneg %p2315
      $region74: #{tpu_custom_call.1} parent=5 // pred_check_branch
        %2318 = sbr.rel (%p2316) target = $region76
      $region75: #{tpu_custom_call.1} parent=5 // pred_region
        %s2319 = ssub.s32 %s23, 2
        // Predicated region
        $region77: #{tpu_custom_call.1} parent=75 // pred_check
          %p2320 = pneg %p214
        $region78: #{tpu_custom_call.1} parent=75 // pred_check_branch
          %2322 = sbr.rel (%p2320) target = $region80
        $region79: #{tpu_custom_call.1} parent=75 // pred_region
          %s2323 = sand.u32 %s199, 1
          %s2324 = scalar_lea.sflag [#allocation4], %s2323
          %s2325 = sand.u32 %s199, 1
          %s2326 = smul.addr %s2325, 256
          %s2327 = scalar_lea.vmem [#allocation11], %s2326
          %2328 = dma.done %s2324, 4096
        $region80: #{tpu_custom_call.1} parent=75 // pred_fallthru
          _
      $region76: #{tpu_custom_call.1} parent=5 // pred_fallthru
        _
    $region6: #{tpu_custom_call.1} parent=1 // loop_footer
      %s27 = sadd.s32 1, %s23
    $region7: #{tpu_custom_call.1} parent=1 // loop_footer_branch
      %22 = sbr.rel target = $region3
    $region8: #{tpu_custom_call.1} parent=1 // loop_exit
      _
    %2329 = vsyncpa [#allocation3], 1
    %s2330 = scalar_lea.sflag [#allocation3], 1
    %2331 = vsyncpa %s2330, 1
    %2332 = vsyncpa [#allocation6], 1
    %2333 = vsyncpa [#allocation9], 1
    %s2334 = scalar_lea.sflag [#allocation9], 1
    %2335 = vsyncpa %s2334, 1
    %2336 = vsyncpa [#allocation4], 1
    %s2337 = scalar_lea.sflag [#allocation4], 1
    %2338 = vsyncpa %s2337, 1

</llo_original>
